<compile_context>
chip_gen: v6e
topology: v6e:2x2x1
jax: 0.10.0
libtpu: 0.0.40
codegen_flags: <defaults>
</compile_context>

<pallas_src>
import jax
import jax.numpy as jnp
import numpy as np
from jax import lax
from jax.experimental import pallas as pl
from jax.experimental.pallas import tpu as pltpu

EMB      = 16                 # MultiAgentTransformer hidden_dim
N_HEADS  = 8                  # nn.TransformerEncoderLayer nhead
HEAD_DIM = EMB // N_HEADS     # = 2
FFN_DIM  = 2048               # nn.TransformerEncoderLayer default dim_feedforward
MIX_OUT  = 128                # MultiAgentTransformer output_dim
LN_EPS   = 1e-5               # nn.LayerNorm default eps
USE_RELU = True               # args.use_relu -> [Tanh, ReLU][use_relu]
NEG_INF  = -1.0e10


def _round_up(x, m):
    return ((x + m - 1) // m) * m


def _layernorm(x, gamma, beta):
    mu = jnp.mean(x, axis=-1, keepdims=True)
    xc = x - mu
    var = jnp.mean(xc * xc, axis=-1, keepdims=True)
    return xc * lax.rsqrt(var + LN_EPS) * gamma + beta


# --------------------------------------------------------------------------------------
# Kernel
# --------------------------------------------------------------------------------------
def _make_kernel(layout, rnn_hidden_dim):
    """layout: name -> (row_offset, n_rows, n_cols) into the f32 parameter slab."""
    H = rnn_hidden_dim

    def kernel(x_ref, avail_ref, h0_ref, f32_ref, bf16_ref,
               prob_ref, hout_ref, h_carry):
        f32 = jnp.float32
        bf16 = jnp.bfloat16

        def ld(name):                      # static slice of the packed f32 slab
            off, r, c = layout[name]
            return f32_ref[off:off + r, 0:c]

        t = pl.program_id(0)

        # GRU hidden state carried in VMEM scratch across the T-step grid.
        @pl.when(t == 0)
        def _():
            h_carry[...] = h0_ref[...]

        x = x_ref[...]                                                         # (N, D)
        n = x.shape[0]

        # ---- embedding Linear(D, 16) --------------------------------------------------
        e = jnp.dot(x, ld("w_emb"), preferred_element_type=f32) + ld("b_emb")  # (N, 16)

        # ---- fused q/k/v projection (packed (16,48) weight) ----------------------------
        qkv = jnp.dot(e, ld("w_qkv"), preferred_element_type=f32) + ld("b_qkv")
        q = qkv[:, 0:EMB]
        k = qkv[:, EMB:2 * EMB]
        v = qkv[:, 2 * EMB:3 * EMB]

        # ---- multi-head self-attention with a SINGLE softmax ---------------------------
        # Rows of the stacked score matrix are (head h, token i) = row h*n + i.
        hn = N_HEADS * n
        head_mask = ld("head_mask")                                            # (H*N, 16)
        row_sel = ld("row_sel")                                                # (N, H*N)
        q_rep = jnp.broadcast_to(q[None, :, :], (N_HEADS, n, EMB)).reshape(hn, EMB)
        qb = q_rep * head_mask
        s = lax.dot_general(qb, k, (((1,), (1,)), ((), ())),
                            preferred_element_type=f32)                        # (H*N, N)
        s = s * f32(1.0 / np.sqrt(HEAD_DIM))
        s = s - jnp.max(s, axis=-1, keepdims=True)
        p = jnp.exp(s)
        p = p * pl.reciprocal(jnp.sum(p, axis=-1, keepdims=True), approx=True)
        o_big = jnp.dot(p, v, preferred_element_type=f32) * head_mask          # (H*N, 16)
        attn = jnp.dot(row_sel, o_big, preferred_element_type=f32)             # (N, 16)
        attn = jnp.dot(attn, ld("wo"), preferred_element_type=f32) + ld("bo")

        # ---- post-norm residual 1 -------------------------------------------------------
        y = _layernorm(e + attn, ld("g1"), ld("be1"))

        # ---- FFN: bf16 operands, f32 accumulation; w2 stored lane-dense (16,2048) -------
        w1 = bf16_ref[0:EMB, :]                                                # (16, 2048)
        w2d = bf16_ref[EMB:2 * EMB, :]                                         # (16, 2048)
        b1 = bf16_ref[2 * EMB:2 * EMB + 1, :].astype(f32)                      # (1, 2048)
        ff = jnp.dot(y.astype(bf16), w1, preferred_element_type=f32) + b1      # (N, 2048)
        ff = jnp.maximum(ff, f32(0.0))                                         # default relu
        ff2 = lax.dot_general(ff.astype(bf16), w2d, (((1,), (1,)), ((), ())),
                              preferred_element_type=f32) + ld("b2")           # (N, 16)
        z = _layernorm(y + ff2, ld("g2"), ld("be2"))

        # ---- [output Linear(16,128) ∘ fc1] folded into one (16,H) matmul + activation ---
        h1 = jnp.dot(z, ld("w_fc1"), preferred_element_type=f32) + ld("b_fc1")  # (N, H)
        h1 = jnp.maximum(h1, f32(0.0)) if USE_RELU else jnp.tanh(h1)

        # ---- GRUCell, fused single GEMM: [h1 | h_prev] @ (2H,4H) -> [r | z | gi_n | gh_n]
        h_prev = h_carry[...]                                                   # (N, H)
        cat = jnp.concatenate([h1, h_prev], axis=1)                             # (N, 2H)
        g = jnp.dot(cat, ld("w_gru"), preferred_element_type=f32) + ld("b_gru") # (N, 4H)
        r = jax.nn.sigmoid(g[:, 0:H])
        zg = jax.nn.sigmoid(g[:, H:2 * H])
        ng = jnp.tanh(g[:, 2 * H:3 * H] + r * g[:, 3 * H:4 * H])
        h_new = (f32(1.0) - zg) * ng + zg * h_prev
        h_carry[...] = h_new
        hout_ref[...] = h_new

        # ---- fc2 + availability mask + softmax (exact divide for output probs) ----------
        logits = jnp.dot(h_new, ld("w_fc2"), preferred_element_type=f32) + ld("b_fc2")
        logits = jnp.where(avail_ref[...] < f32(0.5), f32(NEG_INF), logits)
        logits = logits - jnp.max(logits, axis=-1, keepdims=True)
        exps = jnp.exp(logits)
        prob_ref[...] = exps / jnp.sum(exps, axis=-1, keepdims=True)

    return kernel


def make_actor_rnn_forward(layout, n_agents, input_dim, rnn_hidden_dim, action_dim,
                           slab_f32_shape, slab_bf16_shape):
    """Build a jitted forward over T rollout steps: (T,N,D),(T,N,A),(N,H) -> (T,N,A),(N,H)."""
    kernel = _make_kernel(layout, rnn_hidden_dim)
    N, D, H, A = n_agents, input_dim, rnn_hidden_dim, action_dim
    Rf, Wf = slab_f32_shape
    Rb, Wb = slab_bf16_shape

    def fwd(x_seq, avail_seq, h0, slab_f32, slab_bf16):
        T = x_seq.shape[0]
        prob_seq, h_final = pl.pallas_call(
            kernel,
            grid=(T,),
            in_specs=[
                pl.BlockSpec((None, N, D), lambda t: (t, 0, 0)),   # x, streamed per step
                pl.BlockSpec((None, N, A), lambda t: (t, 0, 0)),   # avail, streamed per step
                pl.BlockSpec((N, H), lambda t: (0, 0)),            # initial hidden, fetched once
                pl.BlockSpec((Rf, Wf), lambda t: (0, 0)),          # f32 weight slab, resident
                pl.BlockSpec((Rb, Wb), lambda t: (0, 0)),          # bf16 FFN slab, resident
            ],
            out_specs=(
                pl.BlockSpec((None, N, A), lambda t: (t, 0, 0)),   # per-step probs
                pl.BlockSpec((N, H), lambda t: (0, 0)),            # final hidden (resident)
            ),
            out_shape=(
                jax.ShapeDtypeStruct((T, N, A), jnp.float32),
                jax.ShapeDtypeStruct((N, H), jnp.float32),
            ),
            scratch_shapes=[pltpu.VMEM((N, H), jnp.float32)],      # GRU carry across steps
            input_output_aliases={2: 1},                           # rnn_hidden updated in place
            compiler_params=pltpu.CompilerParams(
                dimension_semantics=("arbitrary",)),               # GRU carry -> not parallel
        )(x_seq, avail_seq, h0, slab_f32, slab_bf16)
        return prob_seq, h_final

    return jax.jit(fwd)


# --------------------------------------------------------------------------------------
# Parameters
# --------------------------------------------------------------------------------------
def init_params(key, input_dim, rnn_hidden_dim, action_dim):
    """Deterministic synthetic parameters (PyTorch module shapes, stored (in, out))."""
    ks = list(jax.random.split(key, 28))

    def lin(kw, kb, fan_in, fan_out, gain=1.0):
        w = (gain / np.sqrt(fan_in)) * jax.random.normal(kw, (fan_in, fan_out), jnp.float32)
        b = 0.1 * jax.random.normal(kb, (1, fan_out), jnp.float32)
        return w, b

    w_emb, b_emb = lin(ks[0], ks[1], input_dim, EMB)               # embedding
    wq, bq = lin(ks[2], ks[3], EMB, EMB)                           # self-attn in_proj (q)
    wk, bk = lin(ks[4], ks[5], EMB, EMB)                           # self-attn in_proj (k)
    wv, bv = lin(ks[6], ks[7], EMB, EMB)                           # self-attn in_proj (v)
    wo, bo = lin(ks[8], ks[9], EMB, EMB)                           # self-attn out_proj
    g1 = 1.0 + 0.05 * jax.random.normal(ks[10], (1, EMB), jnp.float32)
    be1 = 0.05 * jax.random.normal(ks[11], (1, EMB), jnp.float32)
    w1, b1 = lin(ks[12], ks[13], EMB, FFN_DIM)                     # FFN linear1
    w2, b2 = lin(ks[14], ks[15], FFN_DIM, EMB)                     # FFN linear2
    g2 = 1.0 + 0.05 * jax.random.normal(ks[16], (1, EMB), jnp.float32)
    be2 = 0.05 * jax.random.normal(ks[17], (1, EMB), jnp.float32)
    w_mix, b_mix = lin(ks[18], ks[19], EMB, MIX_OUT)               # transformer output Linear
    w_fc1, b_fc1 = lin(ks[20], ks[21], MIX_OUT, rnn_hidden_dim)    # fc1
    w_ih, b_ih = lin(ks[22], ks[23], rnn_hidden_dim, 3 * rnn_hidden_dim)   # GRU weight_ih
    w_hh, b_hh = lin(ks[24], ks[25], rnn_hidden_dim, 3 * rnn_hidden_dim)   # GRU weight_hh
    w_fc2, b_fc2 = lin(ks[26], ks[27], rnn_hidden_dim, action_dim, gain=0.01)
    return (w_emb, b_emb, wq, bq, wk, bk, wv, bv, wo, bo,
            g1, be1, w1, b1, w2, b2, g2, be2,
            w_mix, b_mix, w_fc1, b_fc1, w_ih, b_ih, w_hh, b_hh,
            w_fc2, b_fc2)


def prepare_params(raw, n_agents):
    """One-time host-side prep: pack q/k/v, fold w_mix into fc1, fuse GRU gate GEMM,
    precompute attention masks, and pack everything into two contiguous slabs
    (one (rows,128) f32, one (48,2048) bf16 with w1 / lane-dense w2 / b1)."""
    (w_emb, b_emb, wq, bq, wk, bk, wv, bv, wo, bo,
     g1, be1, w1, b1, w2, b2, g2, be2,
     w_mix, b_mix, w_fc1, b_fc1, w_ih, b_ih, w_hh, b_hh,
     w_fc2, b_fc2) = [np.asarray(a, np.float32) for a in raw]

    H = w_fc1.shape[1]

    w_qkv = np.concatenate([wq, wk, wv], axis=1)                   # (16, 48)
    b_qkv = np.concatenate([bq, bk, bv], axis=1)                   # (1, 48)

    w_fc1_f = w_mix @ w_fc1                                        # (16, H)
    b_fc1_f = b_mix @ w_fc1 + b_fc1                                # (1, H)

    # Fused GRU gate weight: [h1 | h_prev] @ w_gru -> columns [r | z | gi_n | gh_n].
    w_gru = np.zeros((2 * H, 4 * H), np.float32)
    w_gru[0:H, 0:2 * H] = w_ih[:, 0:2 * H]
    w_gru[0:H, 2 * H:3 * H] = w_ih[:, 2 * H:3 * H]
    w_gru[H:2 * H, 0:2 * H] = w_hh[:, 0:2 * H]
    w_gru[H:2 * H, 3 * H:4 * H] = w_hh[:, 2 * H:3 * H]
    b_gru = np.zeros((1, 4 * H), np.float32)
    b_gru[:, 0:2 * H] = b_ih[:, 0:2 * H] + b_hh[:, 0:2 * H]
    b_gru[:, 2 * H:3 * H] = b_ih[:, 2 * H:3 * H]
    b_gru[:, 3 * H:4 * H] = b_hh[:, 2 * H:3 * H]

    # Host-precomputed attention masks (row h*n+i <-> head h, token i).
    n = n_agents
    hn = N_HEADS * n
    head_mask = (np.arange(hn)[:, None] // n ==
                 np.arange(EMB)[None, :] // HEAD_DIM).astype(np.float32)       # (H*N, 16)
    row_sel = (np.arange(n)[:, None] ==
               (np.arange(hn)[None, :] % n)).astype(np.float32)                 # (N, H*N)

    entries = [
        ("w_emb", w_emb), ("b_emb", b_emb),
        ("w_qkv", w_qkv), ("b_qkv", b_qkv),
        ("wo", wo), ("bo", bo),
        ("g1", g1), ("be1", be1),
        ("g2", g2), ("be2", be2),
        ("b2", b2),
        ("w_fc1", w_fc1_f), ("b_fc1", b_fc1_f),
        ("w_gru", w_gru), ("b_gru", b_gru),
        ("w_fc2", w_fc2), ("b_fc2", b_fc2),
        ("head_mask", head_mask), ("row_sel", row_sel),
    ]
    width = _round_up(max(a.shape[1] for _, a in entries), 128)
    layout, blocks, off = {}, [], 0
    for name, a in entries:
        r, c = a.shape
        rp = _round_up(r, 8)                        # keep every slice 8-sublane aligned
        blk = np.zeros((rp, width), np.float32)
        blk[:r, :c] = a
        blocks.append(blk)
        layout[name] = (off, r, c)
        off += rp
    slab_f32 = jnp.asarray(np.concatenate(blocks, axis=0))

    # bf16 slab: rows 0:16 = w1, rows 16:32 = w2 stored lane-dense (w2.T), row 32 = b1.
    rows_bf = _round_up(2 * EMB + 1, 16)
    slab_bf = np.zeros((rows_bf, FFN_DIM), np.float32)
    slab_bf[0:EMB, :] = w1
    slab_bf[EMB:2 * EMB, :] = w2.T
    slab_bf[2 * EMB, :] = b1[0]
    slab_bf16 = jnp.asarray(slab_bf, dtype=jnp.bfloat16)

    return slab_f32, slab_bf16, layout


# --------------------------------------------------------------------------------------
# Pure numpy (float64) reference of the original module, using the RAW parameters.
# --------------------------------------------------------------------------------------
def reference_forward(raw, x_seq, avail_seq, h0):
    p64 = [np.asarray(a, np.float64) for a in raw]
    (w_emb, b_emb, wq, bq, wk, bk, wv, bv, wo, bo,
     g1, be1, w1, b1, w2, b2, g2, be2,
     w_mix, b_mix, w_fc1, b_fc1, w_ih, b_ih, w_hh, b_hh,
     w_fc2, b_fc2) = p64
    H = w_fc1.shape[1]

    def ln(x, g, b):
        mu = x.mean(-1, keepdims=True)
        var = ((x - mu) ** 2).mean(-1, keepdims=True)
        return (x - mu) / np.sqrt(var + LN_EPS) * g + b

    def softmax(x):
        x = x - x.max(-1, keepdims=True)
        e = np.exp(x)
        return e / e.sum(-1, keepdims=True)

    def sigmoid(x):
        return 1.0 / (1.0 + np.exp(-x))

    h = np.asarray(h0, np.float64)
    probs = []
    for t in range(x_seq.shape[0]):
        x = np.asarray(x_seq[t], np.float64)
        avail = np.asarray(avail_seq[t], np.float64)
        n = x.shape[0]
        e = x @ w_emb + b_emb
        q = e @ wq + bq
        k = e @ wk + bk
        v = e @ wv + bv
        qh = q.reshape(n, N_HEADS, HEAD_DIM).transpose(1, 0, 2)
        kh = k.reshape(n, N_HEADS, HEAD_DIM).transpose(1, 0, 2)
        vh = v.reshape(n, N_HEADS, HEAD_DIM).transpose(1, 0, 2)
        s = (qh @ kh.transpose(0, 2, 1)) / np.sqrt(HEAD_DIM)
        o = softmax(s) @ vh
        attn = o.transpose(1, 0, 2).reshape(n, EMB) @ wo + bo
        y = ln(e + attn, g1, be1)
        ff = np.maximum(y @ w1 + b1, 0.0) @ w2 + b2
        z = ln(y + ff, g2, be2)
        mix = z @ w_mix + b_mix
        pre = mix @ w_fc1 + b_fc1
        h1 = np.maximum(pre, 0.0) if USE_RELU else np.tanh(pre)
        gi = h1 @ w_ih + b_ih
        gh = h @ w_hh + b_hh
        r = sigmoid(gi[:, 0:H] + gh[:, 0:H])
        zz = sigmoid(gi[:, H:2 * H] + gh[:, H:2 * H])
        nn_ = np.tanh(gi[:, 2 * H:3 * H] + r * gh[:, 2 * H:3 * H])
        h = (1.0 - zz) * nn_ + zz * h
        logits = h @ w_fc2 + b_fc2
        logits = np.where(avail < 0.5, NEG_INF, logits)
        probs.append(softmax(logits))
    return np.stack(probs, axis=0), h


if __name__ == "__main__":
    # TODO(synk): for real training throughput, additionally batch environments so the FFN
    # GEMM row dim reaches MXU height (128 on v5e / 256 on v6e-v7x) and mark that batch
    # grid axis "parallel" to use v7x's second TensorCore; the timestep axis must stay
    # "arbitrary" because of the GRU carry.
    N_AGENTS, INPUT_DIM, RNN_HIDDEN, ACTION_DIM = 8, 16, 32, 8
    T_STEPS = 4

    key = jax.random.PRNGKey(0)
    k_x, k_avail, k_params = jax.random.split(key, 3)

    x_seq = jax.random.normal(k_x, (T_STEPS, N_AGENTS, INPUT_DIM), dtype=jnp.float32)
    avail = (jax.random.uniform(k_avail, (T_STEPS, N_AGENTS, ACTION_DIM)) > 0.3).astype(jnp.float32)
    avail = avail.at[..., 0].set(1.0)              # at least one legal action per agent
    h0 = jnp.zeros((N_AGENTS, RNN_HIDDEN), jnp.float32)   # self.rnn_hidden = None -> zeros

    raw = init_params(k_params, INPUT_DIM, RNN_HIDDEN, ACTION_DIM)
    slab_f32, slab_bf16, layout = prepare_params(raw, N_AGENTS)

    fwd = make_actor_rnn_forward(layout, N_AGENTS, INPUT_DIM, RNN_HIDDEN, ACTION_DIM,
                                 slab_f32.shape, slab_bf16.shape)
    prob_seq, h_final = fwd(x_seq, avail, h0, slab_f32, slab_bf16)
    jax.block_until_ready((prob_seq, h_final))

    p = np.asarray(prob_seq)
    av = np.asarray(avail)
    hf = np.asarray(h_final)
    assert p.shape == (T_STEPS, N_AGENTS, ACTION_DIM)
    assert hf.shape == (N_AGENTS, RNN_HIDDEN)
    assert np.all(np.isfinite(p))
    assert np.allclose(p.sum(axis=-1), 1.0, atol=1e-4)     # valid softmax rows
    assert np.all(p[av == 0.0] < 1e-6)                     # masked actions get ~0 probability

    # Parity vs. the raw-parameter reference (tolerance covers bf16 FFN weights,
    # approx reciprocal in the attention softmax, and the folded output/fc1 weights).
    ref_p, ref_h = reference_forward(raw, np.asarray(x_seq), av, np.asarray(h0))
    assert np.allclose(p, ref_p, atol=3e-2)
    assert np.allclose(hf, ref_h, atol=3e-2)
    print("KERNEL_OK")
</pallas_src>

<mosaic_0001>
module attributes {stable_mosaic.version = 11 : i64} {
  func.func @kernel(%arg0: i32, %arg1: memref<1x8x16xf32, #tpu.memory_space<vmem>>, %arg2: memref<1x8x8xf32, #tpu.memory_space<vmem>>, %arg3: memref<8x32xf32, #tpu.memory_space<vmem>>, %arg4: memref<320x128xf32, #tpu.memory_space<vmem>>, %arg5: memref<48x2048xbf16, #tpu.memory_space<vmem>>, %arg6: memref<1x8x8xf32, #tpu.memory_space<vmem>>, %arg7: memref<8x32xf32, #tpu.memory_space<vmem>>, %arg8: memref<8x32xf32, #tpu.memory_space<vmem>>) attributes {dimension_semantics = [#tpu.dimension_semantics<arbitrary>], iteration_bounds = array<i64: 4>, scalar_prefetch = 0 : i64, scratch_operands = 1 : i64, tpu.core_type = #tpu.core_type<tc>, window_params = [{transform_indices = @transform_0, window_bounds = array<i64: 1, 8, 16>}, {transform_indices = @transform_1, window_bounds = array<i64: 1, 8, 8>}, {pipeline_mode = #tpu.pipeline_mode<synchronous>, transform_indices = @transform_2, window_bounds = array<i64: 8, 32>}, {pipeline_mode = #tpu.pipeline_mode<synchronous>, transform_indices = @transform_3, window_bounds = array<i64: 320, 128>}, {pipeline_mode = #tpu.pipeline_mode<synchronous>, transform_indices = @transform_4, window_bounds = array<i64: 48, 2048>}, {transform_indices = @transform_5, window_bounds = array<i64: 1, 8, 8>}, {pipeline_mode = #tpu.pipeline_mode<synchronous>, transform_indices = @transform_6, window_bounds = array<i64: 8, 32>}]} {
    %c0_i32 = arith.constant 0 : i32
    %0 = arith.cmpi eq, %arg0, %c0_i32 : i32
    %1 = arith.extui %0 : i1 to i32
    %c0_i32_0 = arith.constant 0 : i32
    %2 = arith.cmpi ne, %1, %c0_i32_0 : i32
    scf.if %2 {
      %c0_72 = arith.constant 0 : index
      %c0_73 = arith.constant 0 : index
      %168 = vector.load %arg3[%c0_72, %c0_73] : memref<8x32xf32, #tpu.memory_space<vmem>>, vector<8x32xf32>
      %c0_74 = arith.constant 0 : index
      %c0_75 = arith.constant 0 : index
      %169 = vector.load %arg8[%c0_74, %c0_75] : memref<8x32xf32, #tpu.memory_space<vmem>>, vector<8x32xf32>
      tpu.vector_store %arg8[%c0_74, %c0_75], %168 {strides = array<i32>} : memref<8x32xf32, #tpu.memory_space<vmem>>, vector<8x32xf32>,
    } else {
    }
    %c0 = arith.constant 0 : index
    %c0_1 = arith.constant 0 : index
    %c0_2 = arith.constant 0 : index
    %3 = vector.load %arg1[%c0, %c0_1, %c0_2] : memref<1x8x16xf32, #tpu.memory_space<vmem>>, vector<1x8x16xf32>
    %4 = vector.shape_cast %3 : vector<1x8x16xf32> to vector<8x16xf32>
    %c0_3 = arith.constant 0 : index
    %c0_4 = arith.constant 0 : index
    %5 = vector.load %arg4[%c0_3, %c0_4] : memref<320x128xf32, #tpu.memory_space<vmem>>, vector<16x16xf32>
    %cst = arith.constant dense<0.000000e+00> : vector<8x16xf32>
    %6 = tpu.matmul %4, %5, %cst {dimension_numbers = #tpu.dot_dimension_numbers<[1], [0], [0], [1], [0, 0, 1, 1], [], []>} : vector<8x16xf32>, vector<16x16xf32>, vector<8x16xf32> -> vector<8x16xf32>
    %c16 = arith.constant 16 : index
    %c0_5 = arith.constant 0 : index
    %7 = vector.load %arg4[%c16, %c0_5] : memref<320x128xf32, #tpu.memory_space<vmem>>, vector<1x16xf32>
    %8 = vector.broadcast %7 : vector<1x16xf32> to vector<8x16xf32>
    %9 = arith.addf %6, %8 : vector<8x16xf32>
    %c24 = arith.constant 24 : index
    %c0_6 = arith.constant 0 : index
    %10 = vector.load %arg4[%c24, %c0_6] : memref<320x128xf32, #tpu.memory_space<vmem>>, vector<16x48xf32>
    %cst_7 = arith.constant dense<0.000000e+00> : vector<8x48xf32>
    %11 = tpu.matmul %9, %10, %cst_7 {dimension_numbers = #tpu.dot_dimension_numbers<[1], [0], [0], [1], [0, 0, 1, 1], [], []>} : vector<8x16xf32>, vector<16x48xf32>, vector<8x48xf32> -> vector<8x48xf32>
    %c40 = arith.constant 40 : index
    %c0_8 = arith.constant 0 : index
    %12 = vector.load %arg4[%c40, %c0_8] : memref<320x128xf32, #tpu.memory_space<vmem>>, vector<1x48xf32>
    %13 = vector.broadcast %12 : vector<1x48xf32> to vector<8x48xf32>
    %14 = arith.addf %11, %13 : vector<8x48xf32>
    %15 = vector.extract_strided_slice %14 {offsets = [0, 0], sizes = [8, 16], strides = [1, 1]} : vector<8x48xf32> to vector<8x16xf32>
    %16 = vector.extract_strided_slice %14 {offsets = [0, 16], sizes = [8, 16], strides = [1, 1]} : vector<8x48xf32> to vector<8x16xf32>
    %17 = vector.extract_strided_slice %14 {offsets = [0, 32], sizes = [8, 16], strides = [1, 1]} : vector<8x48xf32> to vector<8x16xf32>
    %c248 = arith.constant 248 : index
    %c0_9 = arith.constant 0 : index
    %18 = vector.load %arg4[%c248, %c0_9] : memref<320x128xf32, #tpu.memory_space<vmem>>, vector<64x16xf32>
    %c312 = arith.constant 312 : index
    %c0_10 = arith.constant 0 : index
    %19 = vector.load %arg4[%c312, %c0_10] : memref<320x128xf32, #tpu.memory_space<vmem>>, vector<8x64xf32>
    %20 = vector.shape_cast %15 : vector<8x16xf32> to vector<1x8x16xf32>
    %21 = vector.shape_cast %20 : vector<1x8x16xf32> to vector<1x8x16xf32>
    %22 = vector.broadcast %21 : vector<1x8x16xf32> to vector<8x8x16xf32>
    %23 = vector.shape_cast %22 : vector<8x8x16xf32> to vector<64x16xf32>
    %24 = arith.mulf %23, %18 : vector<64x16xf32>
    %cst_11 = arith.constant dense<0.000000e+00> : vector<64x8xf32>
    %25 = tpu.matmul %24, %16, %cst_11 {dimension_numbers = #tpu.dot_dimension_numbers<[1], [1], [0], [0], [0, 0, 1, 0], [], []>} : vector<64x16xf32>, vector<8x16xf32>, vector<64x8xf32> -> vector<64x8xf32>
    %cst_12 = arith.constant 0.707106769 : f32
    %26 = vector.broadcast %cst_12 : f32 to vector<64x8xf32>
    %27 = arith.mulf %25, %26 : vector<64x8xf32>
    %cst_13 = arith.constant dense<0xFF800000> : vector<64xf32>
    %28 = vector.multi_reduction <maximumf>, %27, %cst_13 [1] : vector<64x8xf32> to vector<64xf32>
    %29 = vector.shape_cast %28 : vector<64xf32> to vector<64x1xf32>
    %30 = vector.broadcast %29 : vector<64x1xf32> to vector<64x8xf32>
    %31 = arith.subf %27, %30 : vector<64x8xf32>
    %32 = math.exp %31 : vector<64x8xf32>
    %cst_14 = arith.constant dense<0.000000e+00> : vector<64xf32>
    %33 = vector.multi_reduction <add>, %32, %cst_14 [1] : vector<64x8xf32> to vector<64xf32>
    %34 = vector.shape_cast %33 : vector<64xf32> to vector<64x1xf32>
    %35 = tpu.reciprocal %34 {approx = true} : vector<64x1xf32> -> vector<64x1xf32>
    %36 = vector.broadcast %35 : vector<64x1xf32> to vector<64x8xf32>
    %37 = arith.mulf %32, %36 : vector<64x8xf32>
    %cst_15 = arith.constant dense<0.000000e+00> : vector<64x16xf32>
    %38 = tpu.matmul %37, %17, %cst_15 {dimension_numbers = #tpu.dot_dimension_numbers<[1], [0], [0], [1], [0, 0, 1, 1], [], []>} : vector<64x8xf32>, vector<8x16xf32>, vector<64x16xf32> -> vector<64x16xf32>
    %39 = arith.mulf %38, %18 : vector<64x16xf32>
    %cst_16 = arith.constant dense<0.000000e+00> : vector<8x16xf32>
    %40 = tpu.matmul %19, %39, %cst_16 {dimension_numbers = #tpu.dot_dimension_numbers<[1], [0], [0], [1], [0, 0, 1, 1], [], []>} : vector<8x64xf32>, vector<64x16xf32>, vector<8x16xf32> -> vector<8x16xf32>
    %c48 = arith.constant 48 : index
    %c0_17 = arith.constant 0 : index
    %41 = vector.load %arg4[%c48, %c0_17] : memref<320x128xf32, #tpu.memory_space<vmem>>, vector<16x16xf32>
    %cst_18 = arith.constant dense<0.000000e+00> : vector<8x16xf32>
    %42 = tpu.matmul %40, %41, %cst_18 {dimension_numbers = #tpu.dot_dimension_numbers<[1], [0], [0], [1], [0, 0, 1, 1], [], []>} : vector<8x16xf32>, vector<16x16xf32>, vector<8x16xf32> -> vector<8x16xf32>
    %c64 = arith.constant 64 : index
    %c0_19 = arith.constant 0 : index
    %43 = vector.load %arg4[%c64, %c0_19] : memref<320x128xf32, #tpu.memory_space<vmem>>, vector<1x16xf32>
    %44 = vector.broadcast %43 : vector<1x16xf32> to vector<8x16xf32>
    %45 = arith.addf %42, %44 : vector<8x16xf32>
    %46 = arith.addf %9, %45 : vector<8x16xf32>
    %c72 = arith.constant 72 : index
    %c0_20 = arith.constant 0 : index
    %47 = vector.load %arg4[%c72, %c0_20] : memref<320x128xf32, #tpu.memory_space<vmem>>, vector<1x16xf32>
    %c80 = arith.constant 80 : index
    %c0_21 = arith.constant 0 : index
    %48 = vector.load %arg4[%c80, %c0_21] : memref<320x128xf32, #tpu.memory_space<vmem>>, vector<1x16xf32>
    %cst_22 = arith.constant dense<0.000000e+00> : vector<8xf32>
    %49 = vector.multi_reduction <add>, %46, %cst_22 [1] : vector<8x16xf32> to vector<8xf32>
    %50 = vector.shape_cast %49 : vector<8xf32> to vector<8x1xf32>
    %cst_23 = arith.constant 1.600000e+01 : f32
    %51 = vector.broadcast %cst_23 : f32 to vector<8x1xf32>
    %52 = arith.divf %50, %51 : vector<8x1xf32>
    %53 = vector.broadcast %52 : vector<8x1xf32> to vector<8x16xf32>
    %54 = arith.subf %46, %53 : vector<8x16xf32>
    %55 = arith.mulf %54, %54 : vector<8x16xf32>
    %cst_24 = arith.constant dense<0.000000e+00> : vector<8xf32>
    %56 = vector.multi_reduction <add>, %55, %cst_24 [1] : vector<8x16xf32> to vector<8xf32>
    %57 = vector.shape_cast %56 : vector<8xf32> to vector<8x1xf32>
    %cst_25 = arith.constant 1.600000e+01 : f32
    %58 = vector.broadcast %cst_25 : f32 to vector<8x1xf32>
    %59 = arith.divf %57, %58 : vector<8x1xf32>
    %cst_26 = arith.constant 9.99999974E-6 : f32
    %60 = vector.broadcast %cst_26 : f32 to vector<8x1xf32>
    %61 = arith.addf %59, %60 : vector<8x1xf32>
    %62 = math.rsqrt %61 : vector<8x1xf32>
    %63 = vector.broadcast %62 : vector<8x1xf32> to vector<8x16xf32>
    %64 = arith.mulf %54, %63 : vector<8x16xf32>
    %65 = vector.broadcast %47 : vector<1x16xf32> to vector<8x16xf32>
    %66 = arith.mulf %64, %65 : vector<8x16xf32>
    %67 = vector.broadcast %48 : vector<1x16xf32> to vector<8x16xf32>
    %68 = arith.addf %66, %67 : vector<8x16xf32>
    %c0_27 = arith.constant 0 : index
    %c0_28 = arith.constant 0 : index
    %69 = vector.load %arg5[%c0_27, %c0_28] : memref<48x2048xbf16, #tpu.memory_space<vmem>>, vector<16x2048xbf16>
    %c16_29 = arith.constant 16 : index
    %c0_30 = arith.constant 0 : index
    %70 = vector.load %arg5[%c16_29, %c0_30] : memref<48x2048xbf16, #tpu.memory_space<vmem>>, vector<16x2048xbf16>
    %c32 = arith.constant 32 : index
    %c0_31 = arith.constant 0 : index
    %71 = vector.load %arg5[%c32, %c0_31] : memref<48x2048xbf16, #tpu.memory_space<vmem>>, vector<1x2048xbf16>
    %72 = arith.extf %71 : vector<1x2048xbf16> to vector<1x2048xf32>
    %73 = arith.truncf %68 : vector<8x16xf32> to vector<8x16xbf16>
    %cst_32 = arith.constant dense<0.000000e+00> : vector<8x2048xf32>
    %74 = tpu.matmul %73, %69, %cst_32 {dimension_numbers = #tpu.dot_dimension_numbers<[1], [0], [0], [1], [0, 0, 1, 1], [], []>} : vector<8x16xbf16>, vector<16x2048xbf16>, vector<8x2048xf32> -> vector<8x2048xf32>
    %75 = vector.broadcast %72 : vector<1x2048xf32> to vector<8x2048xf32>
    %76 = arith.addf %74, %75 : vector<8x2048xf32>
    %cst_33 = arith.constant 0.000000e+00 : f32
    %77 = vector.broadcast %cst_33 : f32 to vector<8x2048xf32>
    %78 = arith.maximumf %76, %77 : vector<8x2048xf32>
    %79 = arith.truncf %78 : vector<8x2048xf32> to vector<8x2048xbf16>
    %cst_34 = arith.constant dense<0.000000e+00> : vector<8x16xf32>
    %80 = tpu.matmul %79, %70, %cst_34 {dimension_numbers = #tpu.dot_dimension_numbers<[1], [1], [0], [0], [0, 0, 1, 0], [], []>} : vector<8x2048xbf16>, vector<16x2048xbf16>, vector<8x16xf32> -> vector<8x16xf32>
    %c104 = arith.constant 104 : index
    %c0_35 = arith.constant 0 : index
    %81 = vector.load %arg4[%c104, %c0_35] : memref<320x128xf32, #tpu.memory_space<vmem>>, vector<1x16xf32>
    %82 = vector.broadcast %81 : vector<1x16xf32> to vector<8x16xf32>
    %83 = arith.addf %80, %82 : vector<8x16xf32>
    %84 = arith.addf %68, %83 : vector<8x16xf32>
    %c88 = arith.constant 88 : index
    %c0_36 = arith.constant 0 : index
    %85 = vector.load %arg4[%c88, %c0_36] : memref<320x128xf32, #tpu.memory_space<vmem>>, vector<1x16xf32>
    %c96 = arith.constant 96 : index
    %c0_37 = arith.constant 0 : index
    %86 = vector.load %arg4[%c96, %c0_37] : memref<320x128xf32, #tpu.memory_space<vmem>>, vector<1x16xf32>
    %cst_38 = arith.constant dense<0.000000e+00> : vector<8xf32>
    %87 = vector.multi_reduction <add>, %84, %cst_38 [1] : vector<8x16xf32> to vector<8xf32>
    %88 = vector.shape_cast %87 : vector<8xf32> to vector<8x1xf32>
    %cst_39 = arith.constant 1.600000e+01 : f32
    %89 = vector.broadcast %cst_39 : f32 to vector<8x1xf32>
    %90 = arith.divf %88, %89 : vector<8x1xf32>
    %91 = vector.broadcast %90 : vector<8x1xf32> to vector<8x16xf32>
    %92 = arith.subf %84, %91 : vector<8x16xf32>
    %93 = arith.mulf %92, %92 : vector<8x16xf32>
    %cst_40 = arith.constant dense<0.000000e+00> : vector<8xf32>
    %94 = vector.multi_reduction <add>, %93, %cst_40 [1] : vector<8x16xf32> to vector<8xf32>
    %95 = vector.shape_cast %94 : vector<8xf32> to vector<8x1xf32>
    %cst_41 = arith.constant 1.600000e+01 : f32
    %96 = vector.broadcast %cst_41 : f32 to vector<8x1xf32>
    %97 = arith.divf %95, %96 : vector<8x1xf32>
    %cst_42 = arith.constant 9.99999974E-6 : f32
    %98 = vector.broadcast %cst_42 : f32 to vector<8x1xf32>
    %99 = arith.addf %97, %98 : vector<8x1xf32>
    %100 = math.rsqrt %99 : vector<8x1xf32>
    %101 = vector.broadcast %100 : vector<8x1xf32> to vector<8x16xf32>
    %102 = arith.mulf %92, %101 : vector<8x16xf32>
    %103 = vector.broadcast %85 : vector<1x16xf32> to vector<8x16xf32>
    %104 = arith.mulf %102, %103 : vector<8x16xf32>
    %105 = vector.broadcast %86 : vector<1x16xf32> to vector<8x16xf32>
    %106 = arith.addf %104, %105 : vector<8x16xf32>
    %c112 = arith.constant 112 : index
    %c0_43 = arith.constant 0 : index
    %107 = vector.load %arg4[%c112, %c0_43] : memref<320x128xf32, #tpu.memory_space<vmem>>, vector<16x32xf32>
    %cst_44 = arith.constant dense<0.000000e+00> : vector<8x32xf32>
    %108 = tpu.matmul %106, %107, %cst_44 {dimension_numbers = #tpu.dot_dimension_numbers<[1], [0], [0], [1], [0, 0, 1, 1], [], []>} : vector<8x16xf32>, vector<16x32xf32>, vector<8x32xf32> -> vector<8x32xf32>
    %c128 = arith.constant 128 : index
    %c0_45 = arith.constant 0 : index
    %109 = vector.load %arg4[%c128, %c0_45] : memref<320x128xf32, #tpu.memory_space<vmem>>, vector<1x32xf32>
    %110 = vector.broadcast %109 : vector<1x32xf32> to vector<8x32xf32>
    %111 = arith.addf %108, %110 : vector<8x32xf32>
    %cst_46 = arith.constant 0.000000e+00 : f32
    %112 = vector.broadcast %cst_46 : f32 to vector<8x32xf32>
    %113 = arith.maximumf %111, %112 : vector<8x32xf32>
    %c0_47 = arith.constant 0 : index
    %c0_48 = arith.constant 0 : index
    %114 = vector.load %arg8[%c0_47, %c0_48] : memref<8x32xf32, #tpu.memory_space<vmem>>, vector<8x32xf32>
    %115 = tpu.concatenate %113, %114 in 1 : vector<8x32xf32>, vector<8x32xf32> -> vector<8x64xf32>
    %c136 = arith.constant 136 : index
    %c0_49 = arith.constant 0 : index
    %116 = vector.load %arg4[%c136, %c0_49] : memref<320x128xf32, #tpu.memory_space<vmem>>, vector<64x128xf32>
    %cst_50 = arith.constant dense<0.000000e+00> : vector<8x128xf32>
    %117 = tpu.matmul %115, %116, %cst_50 {dimension_numbers = #tpu.dot_dimension_numbers<[1], [0], [0], [1], [0, 0, 1, 1], [], []>} : vector<8x64xf32>, vector<64x128xf32>, vector<8x128xf32> -> vector<8x128xf32>
    %c200 = arith.constant 200 : index
    %c0_51 = arith.constant 0 : index
    %118 = vector.load %arg4[%c200, %c0_51] : memref<320x128xf32, #tpu.memory_space<vmem>>, vector<1x128xf32>
    %119 = vector.broadcast %118 : vector<1x128xf32> to vector<8x128xf32>
    %120 = arith.addf %117, %119 : vector<8x128xf32>
    %121 = vector.extract_strided_slice %120 {offsets = [0, 0], sizes = [8, 32], strides = [1, 1]} : vector<8x128xf32> to vector<8x32xf32>
    %122 = arith.negf %121 : vector<8x32xf32>
    %123 = math.exp %122 : vector<8x32xf32>
    %cst_52 = arith.constant 1.000000e+00 : f32
    %124 = vector.broadcast %cst_52 : f32 to vector<8x32xf32>
    %125 = arith.addf %124, %123 : vector<8x32xf32>
    %126 = arith.divf %124, %125 : vector<8x32xf32>
    %127 = vector.extract_strided_slice %120 {offsets = [0, 32], sizes = [8, 32], strides = [1, 1]} : vector<8x128xf32> to vector<8x32xf32>
    %128 = arith.negf %127 : vector<8x32xf32>
    %129 = math.exp %128 : vector<8x32xf32>
    %cst_53 = arith.constant 1.000000e+00 : f32
    %130 = vector.broadcast %cst_53 : f32 to vector<8x32xf32>
    %131 = arith.addf %130, %129 : vector<8x32xf32>
    %132 = arith.divf %130, %131 : vector<8x32xf32>
    %133 = vector.extract_strided_slice %120 {offsets = [0, 64], sizes = [8, 32], strides = [1, 1]} : vector<8x128xf32> to vector<8x32xf32>
    %134 = vector.extract_strided_slice %120 {offsets = [0, 96], sizes = [8, 32], strides = [1, 1]} : vector<8x128xf32> to vector<8x32xf32>
    %135 = arith.mulf %126, %134 : vector<8x32xf32>
    %136 = arith.addf %133, %135 : vector<8x32xf32>
    %137 = math.tanh %136 : vector<8x32xf32>
    %cst_54 = arith.constant 1.000000e+00 : f32
    %138 = vector.broadcast %cst_54 : f32 to vector<8x32xf32>
    %139 = arith.subf %138, %132 : vector<8x32xf32>
    %140 = arith.mulf %139, %137 : vector<8x32xf32>
    %141 = arith.mulf %132, %114 : vector<8x32xf32>
    %142 = arith.addf %140, %141 : vector<8x32xf32>
    %c0_55 = arith.constant 0 : index
    %c0_56 = arith.constant 0 : index
    %143 = vector.load %arg8[%c0_55, %c0_56] : memref<8x32xf32, #tpu.memory_space<vmem>>, vector<8x32xf32>
    tpu.vector_store %arg8[%c0_55, %c0_56], %142 {strides = array<i32>} : memref<8x32xf32, #tpu.memory_space<vmem>>, vector<8x32xf32>,
    %c0_57 = arith.constant 0 : index
    %c0_58 = arith.constant 0 : index
    %144 = vector.load %arg7[%c0_57, %c0_58] : memref<8x32xf32, #tpu.memory_space<vmem>>, vector<8x32xf32>
    tpu.vector_store %arg7[%c0_57, %c0_58], %142 {strides = array<i32>} : memref<8x32xf32, #tpu.memory_space<vmem>>, vector<8x32xf32>,
    %c208 = arith.constant 208 : index
    %c0_59 = arith.constant 0 : index
    %145 = vector.load %arg4[%c208, %c0_59] : memref<320x128xf32, #tpu.memory_space<vmem>>, vector<32x8xf32>
    %cst_60 = arith.constant dense<0.000000e+00> : vector<8x8xf32>
    %146 = tpu.matmul %142, %145, %cst_60 {dimension_numbers = #tpu.dot_dimension_numbers<[1], [0], [0], [1], [0, 0, 1, 1], [], []>} : vector<8x32xf32>, vector<32x8xf32>, vector<8x8xf32> -> vector<8x8xf32>
    %c240 = arith.constant 240 : index
    %c0_61 = arith.constant 0 : index
    %147 = vector.load %arg4[%c240, %c0_61] : memref<320x128xf32, #tpu.memory_space<vmem>>, vector<1x8xf32>
    %148 = vector.broadcast %147 : vector<1x8xf32> to vector<8x8xf32>
    %149 = arith.addf %146, %148 : vector<8x8xf32>
    %c0_62 = arith.constant 0 : index
    %c0_63 = arith.constant 0 : index
    %c0_64 = arith.constant 0 : index
    %150 = vector.load %arg2[%c0_62, %c0_63, %c0_64] : memref<1x8x8xf32, #tpu.memory_space<vmem>>, vector<1x8x8xf32>
    %151 = vector.shape_cast %150 : vector<1x8x8xf32> to vector<8x8xf32>
    %cst_65 = arith.constant 5.000000e-01 : f32
    %152 = vector.broadcast %cst_65 : f32 to vector<8x8xf32>
    %153 = arith.cmpf olt, %151, %152 : vector<8x8xf32>
    %cst_66 = arith.constant -1.000000e+10 : f32
    %154 = vector.broadcast %cst_66 : f32 to vector<8x8xf32>
    %155 = arith.select %153, %154, %149 : vector<8x8xi1>, vector<8x8xf32>
    %cst_67 = arith.constant dense<0xFF800000> : vector<8xf32>
    %156 = vector.multi_reduction <maximumf>, %155, %cst_67 [1] : vector<8x8xf32> to vector<8xf32>
    %157 = vector.shape_cast %156 : vector<8xf32> to vector<8x1xf32>
    %158 = vector.broadcast %157 : vector<8x1xf32> to vector<8x8xf32>
    %159 = arith.subf %155, %158 : vector<8x8xf32>
    %160 = math.exp %159 : vector<8x8xf32>
    %cst_68 = arith.constant dense<0.000000e+00> : vector<8xf32>
    %161 = vector.multi_reduction <add>, %160, %cst_68 [1] : vector<8x8xf32> to vector<8xf32>
    %162 = vector.shape_cast %161 : vector<8xf32> to vector<8x1xf32>
    %163 = vector.broadcast %162 : vector<8x1xf32> to vector<8x8xf32>
    %164 = arith.divf %160, %163 : vector<8x8xf32>
    %c0_69 = arith.constant 0 : index
    %c0_70 = arith.constant 0 : index
    %c0_71 = arith.constant 0 : index
    %165 = vector.load %arg6[%c0_69, %c0_70, %c0_71] : memref<1x8x8xf32, #tpu.memory_space<vmem>>, vector<1x8x8xf32>
    %166 = vector.shape_cast %165 : vector<1x8x8xf32> to vector<8x8xf32>
    %167 = vector.shape_cast %164 : vector<8x8xf32> to vector<1x8x8xf32>
    tpu.vector_store %arg6[%c0_69, %c0_70, %c0_71], %167 {strides = array<i32>} : memref<1x8x8xf32, #tpu.memory_space<vmem>>, vector<1x8x8xf32>,
    return
  }
  func.func @transform_0(%arg0: i32) -> (i32, i32, i32) {
    %c0_i32 = arith.constant 0 : i32
    %c0_i32_0 = arith.constant 0 : i32
    %c0_i32_1 = arith.constant 0 : i32
    return %arg0, %c0_i32, %c0_i32_0 : i32, i32, i32
  }
  func.func @transform_1(%arg0: i32) -> (i32, i32, i32) {
    %c0_i32 = arith.constant 0 : i32
    %c0_i32_0 = arith.constant 0 : i32
    %c0_i32_1 = arith.constant 0 : i32
    return %arg0, %c0_i32, %c0_i32_0 : i32, i32, i32
  }
  func.func @transform_2(%arg0: i32) -> (i32, i32) {
    %c0_i32 = arith.constant 0 : i32
    %c0_i32_0 = arith.constant 0 : i32
    %c0_i32_1 = arith.constant 0 : i32
    return %c0_i32, %c0_i32_0 : i32, i32
  }
  func.func @transform_3(%arg0: i32) -> (i32, i32) {
    %c0_i32 = arith.constant 0 : i32
    %c0_i32_0 = arith.constant 0 : i32
    %c0_i32_1 = arith.constant 0 : i32
    return %c0_i32, %c0_i32_0 : i32, i32
  }
  func.func @transform_4(%arg0: i32) -> (i32, i32) {
    %c0_i32 = arith.constant 0 : i32
    %c0_i32_0 = arith.constant 0 : i32
    %c0_i32_1 = arith.constant 0 : i32
    return %c0_i32, %c0_i32_0 : i32, i32
  }
  func.func @transform_5(%arg0: i32) -> (i32, i32, i32) {
    %c0_i32 = arith.constant 0 : i32
    %c0_i32_0 = arith.constant 0 : i32
    %c0_i32_1 = arith.constant 0 : i32
    return %arg0, %c0_i32, %c0_i32_0 : i32, i32, i32
  }
  func.func @transform_6(%arg0: i32) -> (i32, i32) {
    %c0_i32 = arith.constant 0 : i32
    %c0_i32_0 = arith.constant 0 : i32
    %c0_i32_1 = arith.constant 0 : i32
    return %c0_i32, %c0_i32_0 : i32, i32
  }
}

</mosaic_0001>

<llo_original>
// kernel: fwd.1
$region0: #{fwd.1}
  #allocation0 [shape = 'u32[]', space=smem, size = 0x4, offset = 0x4, fixed_abs, tag = 'smem constant byte address 0x4 - core index']
  #allocation1 [shape = 'u32[144,128]{1,0:T(1,128)}', space=vmem, size = 0x12000, scoped, tag = 'internal scratch']
  #allocation2 [shape = 'f32[8,32]{1,0:T(8,128)}', space=vmem, size = 0x1000, scoped, tag = 'scratch operand']
  %s0 = inlined_call_operand.hbm [shape: f32[4,8,16], index: 0, kind: input, shape index: {}]
  %s1 = inlined_call_operand.hbm [shape: f32[4,8,8], index: 1, kind: input, shape index: {}]
  %s2 = inlined_call_operand.hbm [shape: f32[8,32], index: 2, kind: input, shape index: {}, may-alias: {2,6}]
  %s3 = inlined_call_operand.hbm [shape: f32[320,128], index: 3, kind: input, shape index: {}]
  %s4 = inlined_call_operand.hbm [shape: bf16[48,2048], index: 4, kind: input, shape index: {}]
  %s5 = inlined_call_operand.hbm [shape: f32[4,8,8], index: 5, kind: output, shape index: {0}]
  %s6 = inlined_call_operand.hbm [shape: f32[8,32], index: 6, kind: output, shape index: {1}, may-alias: {2,6}]
  %7 = xla_tuple %s5, %s6
  %s8 = sld [smem:[#allocation0]]
  $region85: #{fwd.1} parent=0
    _
  %s10 = ssub.s32 1, %s8
  %s11 = scalar_select 0, %s10, %s8
  $region1: #{fwd.1} parent=0
    #allocation3 [shape = 'u8[8192]{0}', space=vmem, size = 0x2000, scoped, tag = 'input window, operand 0']
    #allocation4 [shape = 's32[2]{0}', space=sflag, size = 0x8, scoped, tag = 'scoped memory for fwd.1']
    #allocation5 [shape = 's32[2]{0}', space=sflag, size = 0x8, scoped, tag = 'scoped memory for fwd.1']
    #allocation6 [shape = 'u8[8192]{0}', space=vmem, size = 0x2000, scoped, tag = 'input window, operand 1']
    #allocation7 [shape = 's32[2]{0}', space=sflag, size = 0x8, scoped, tag = 'scoped memory for fwd.1']
    #allocation8 [shape = 'u8[4096]{0}', space=vmem, size = 0x1000, scoped, tag = 'input window, operand 2, single buffered']
    #allocation9 [shape = 'u8[163840]{0}', space=vmem, size = 0x28000, scoped, tag = 'input window, operand 3, single buffered']
    #allocation10 [shape = 's32[1]{0}', space=sflag, size = 0x4, scoped, tag = 'scoped memory for fwd.1']
    #allocation11 [shape = 'u8[196608]{0}', space=vmem, size = 0x30000, scoped, tag = 'input window, operand 4, single buffered']
    #allocation12 [shape = 'u8[8192]{0}', space=vmem, size = 0x2000, scoped, tag = 'output window, operand 0']
    #allocation13 [shape = 'u8[4096]{0}', space=vmem, size = 0x1000, scoped, tag = 'output window, operand 1, single buffered']
    #allocation14 [shape = 's32[1]{0}', space=sflag, size = 0x4, scoped, tag = 'scoped memory for fwd.1']
    %12 = vsyncpa [#allocation4], 0
    %s13 = scalar_lea.sflag [#allocation4], 1
    %14 = vsyncpa %s13, 0
    %15 = vsyncpa [#allocation7], 0
    %s16 = scalar_lea.sflag [#allocation7], 1
    %17 = vsyncpa %s16, 0
    %18 = vsyncpa [#allocation10], 0
    %19 = vsyncpa [#allocation5], 0
    %s20 = scalar_lea.sflag [#allocation5], 1
    %21 = vsyncpa %s20, 0
    %22 = vsyncpa [#allocation14], 0
    loop: start=0, step=1, limit=6
    $region2: #{fwd.1} parent=1 // loop_pre_header
      _
    $region3: #{fwd.1} parent=1 // loop_header
      %s24 = sphi 0, %s28
      %p25 = scmp.ge.s32.totalorder %s24, 6
      %s34 = sphi 0, %s36
      %s37 = sphi 0, %s34
      %s38 = sphi 0, %s37
      %s54 = sphi 0, %s38
      %s60 = sphi 0, %s62
      %s63 = sphi 0, %s60
      %s64 = sphi 0, %s63
      %s80 = sphi 0, %s64
      %s84 = sphi 0, %s84
      %s86 = sphi 0, %s84
      %s87 = sphi 0, %s86
      %s101 = sphi 0, %s87
      %s105 = sphi 0, %s105
      %s107 = sphi 0, %s105
      %s108 = sphi 0, %s107
      %s122 = sphi 0, %s108
      %s126 = sphi 0, %s126
      %s128 = sphi 0, %s126
      %s129 = sphi 0, %s128
      %s143 = sphi 0, %s129
      %s149 = sphi 0, %s151
      %s152 = sphi 0, %s149
      %s153 = sphi 0, %s152
      %s169 = sphi 0, %s153
      %s173 = sphi 0, %s173
      %s175 = sphi 0, %s173
      %s176 = sphi 0, %s175
      %s190 = sphi 0, %s176
    $region4: #{fwd.1} parent=1 // loop_header_branch
      %27 = sbr.rel (%p25) target = $region8
    $region5: #{fwd.1} parent=1 // loop_body
      %s29 = ssub.s32 %s24, 1
      %s30 = ssub.s32 %s24, 2
      %s31 = sadd.s32 %s24, 1
      %s32 = ssub.s32 %s24, %s31
      %p33 = scmp.eq.s32.totalorder %s32, 0
      %s35 = sadd.s32 %s34, 1
      %s36 = scalar_select %p33, %s34, %s35
      %p39 = pneg %p33
      %p40 = scmp.eq.s32.totalorder %s24, 3
      %p41 = por %p39, %p40
      %p42 = scmp.ne.s32.totalorder %s34, %s37
      %p43 = scmp.eq.s32.totalorder %s24, 0
      %p44 = por %p42, %p43
      %p45 = scmp.ne.s32.totalorder %s34, %s37
      %p46 = scmp.eq.s32.totalorder %s29, 3
      %p47 = por %p45, %p46
      %p48 = scmp.ne.s32.totalorder %s37, %s38
      %p49 = scmp.eq.s32.totalorder %s29, 0
      %p50 = por %p48, %p49
      %p51 = scmp.ne.s32.totalorder %s37, %s38
      %p52 = scmp.eq.s32.totalorder %s30, 3
      %p53 = por %p51, %p52
      %p55 = scmp.ne.s32.totalorder %s38, %s54
      %p56 = scmp.eq.s32.totalorder %s30, 0
      %p57 = por %p55, %p56
      %s58 = ssub.s32 %s24, %s31
      %p59 = scmp.eq.s32.totalorder %s58, 0
      %s61 = sadd.s32 %s60, 1
      %s62 = scalar_select %p59, %s60, %s61
      %p65 = pneg %p59
      %p66 = scmp.eq.s32.totalorder %s24, 3
      %p67 = por %p65, %p66
      %p68 = scmp.ne.s32.totalorder %s60, %s63
      %p69 = scmp.eq.s32.totalorder %s24, 0
      %p70 = por %p68, %p69
      %p71 = scmp.ne.s32.totalorder %s60, %s63
      %p72 = scmp.eq.s32.totalorder %s29, 3
      %p73 = por %p71, %p72
      %p74 = scmp.ne.s32.totalorder %s63, %s64
      %p75 = scmp.eq.s32.totalorder %s29, 0
      %p76 = por %p74, %p75
      %p77 = scmp.ne.s32.totalorder %s63, %s64
      %p78 = scmp.eq.s32.totalorder %s30, 3
      %p79 = por %p77, %p78
      %p81 = scmp.ne.s32.totalorder %s64, %s80
      %p82 = scmp.eq.s32.totalorder %s30, 0
      %p83 = por %p81, %p82
      %s85 = sadd.s32 %s84, 1
      %p88 = scmp.eq.s32.totalorder %s24, 3
      %p89 = scmp.ne.s32.totalorder %s84, %s86
      %p90 = scmp.eq.s32.totalorder %s24, 0
      %p91 = por %p89, %p90
      %p92 = scmp.ne.s32.totalorder %s84, %s86
      %p93 = scmp.eq.s32.totalorder %s29, 3
      %p94 = por %p92, %p93
      %p95 = scmp.ne.s32.totalorder %s86, %s87
      %p96 = scmp.eq.s32.totalorder %s29, 0
      %p97 = por %p95, %p96
      %p98 = scmp.ne.s32.totalorder %s86, %s87
      %p99 = scmp.eq.s32.totalorder %s30, 3
      %p100 = por %p98, %p99
      %p102 = scmp.ne.s32.totalorder %s87, %s101
      %p103 = scmp.eq.s32.totalorder %s30, 0
      %p104 = por %p102, %p103
      %s106 = sadd.s32 %s105, 1
      %p109 = scmp.eq.s32.totalorder %s24, 3
      %p110 = scmp.ne.s32.totalorder %s105, %s107
      %p111 = scmp.eq.s32.totalorder %s24, 0
      %p112 = por %p110, %p111
      %p113 = scmp.ne.s32.totalorder %s105, %s107
      %p114 = scmp.eq.s32.totalorder %s29, 3
      %p115 = por %p113, %p114
      %p116 = scmp.ne.s32.totalorder %s107, %s108
      %p117 = scmp.eq.s32.totalorder %s29, 0
      %p118 = por %p116, %p117
      %p119 = scmp.ne.s32.totalorder %s107, %s108
      %p120 = scmp.eq.s32.totalorder %s30, 3
      %p121 = por %p119, %p120
      %p123 = scmp.ne.s32.totalorder %s108, %s122
      %p124 = scmp.eq.s32.totalorder %s30, 0
      %p125 = por %p123, %p124
      %s127 = sadd.s32 %s126, 1
      %p130 = scmp.eq.s32.totalorder %s24, 3
      %p131 = scmp.ne.s32.totalorder %s126, %s128
      %p132 = scmp.eq.s32.totalorder %s24, 0
      %p133 = por %p131, %p132
      %p134 = scmp.ne.s32.totalorder %s126, %s128
      %p135 = scmp.eq.s32.totalorder %s29, 3
      %p136 = por %p134, %p135
      %p137 = scmp.ne.s32.totalorder %s128, %s129
      %p138 = scmp.eq.s32.totalorder %s29, 0
      %p139 = por %p137, %p138
      %p140 = scmp.ne.s32.totalorder %s128, %s129
      %p141 = scmp.eq.s32.totalorder %s30, 3
      %p142 = por %p140, %p141
      %p144 = scmp.ne.s32.totalorder %s129, %s143
      %p145 = scmp.eq.s32.totalorder %s30, 0
      %p146 = por %p144, %p145
      %s147 = ssub.s32 %s24, %s31
      %p148 = scmp.eq.s32.totalorder %s147, 0
      %s150 = sadd.s32 %s149, 1
      %s151 = scalar_select %p148, %s149, %s150
      %p154 = pneg %p148
      %p155 = scmp.eq.s32.totalorder %s24, 3
      %p156 = por %p154, %p155
      %p157 = scmp.ne.s32.totalorder %s149, %s152
      %p158 = scmp.eq.s32.totalorder %s24, 0
      %p159 = por %p157, %p158
      %p160 = scmp.ne.s32.totalorder %s149, %s152
      %p161 = scmp.eq.s32.totalorder %s29, 3
      %p162 = por %p160, %p161
      %p163 = scmp.ne.s32.totalorder %s152, %s153
      %p164 = scmp.eq.s32.totalorder %s29, 0
      %p165 = por %p163, %p164
      %p166 = scmp.ne.s32.totalorder %s152, %s153
      %p167 = scmp.eq.s32.totalorder %s30, 3
      %p168 = por %p166, %p167
      %p170 = scmp.ne.s32.totalorder %s153, %s169
      %p171 = scmp.eq.s32.totalorder %s30, 0
      %p172 = por %p170, %p171
      %s174 = sadd.s32 %s173, 1
      %p177 = scmp.eq.s32.totalorder %s24, 3
      %p178 = scmp.ne.s32.totalorder %s173, %s175
      %p179 = scmp.eq.s32.totalorder %s24, 0
      %p180 = por %p178, %p179
      %p181 = scmp.ne.s32.totalorder %s173, %s175
      %p182 = scmp.eq.s32.totalorder %s29, 3
      %p183 = por %p181, %p182
      %p184 = scmp.ne.s32.totalorder %s175, %s176
      %p185 = scmp.eq.s32.totalorder %s29, 0
      %p186 = por %p184, %p185
      %p187 = scmp.ne.s32.totalorder %s175, %s176
      %p188 = scmp.eq.s32.totalorder %s30, 3
      %p189 = por %p187, %p188
      %p191 = scmp.ne.s32.totalorder %s176, %s190
      %p192 = scmp.eq.s32.totalorder %s30, 0
      %p193 = por %p191, %p192
      %p194 = scmp.le.s32.totalorder 1, %s24
      %p195 = scmp.lt.s32.totalorder %s24, 5
      %p196 = pnand %p194, %p195
      %p197 = pneg %p196
      // Predicated region
      $region9: #{fwd.1} parent=5 // pred_check
        _
      $region10: #{fwd.1} parent=5 // pred_check_branch
        %199 = sbr.rel (%p196) target = $region12
      $region11: #{fwd.1} parent=5 // pred_region
        %s200 = ssub.s32 %s24, 1
        // Predicated region
        $region13: #{fwd.1} parent=11 // pred_check
          %p201 = pneg %p97
        $region14: #{fwd.1} parent=11 // pred_check_branch
          %203 = sbr.rel (%p201) target = $region16
        $region15: #{fwd.1} parent=11 // pred_region
          %s205 = ssub.s32 128, 128
          %206 = vsyncadd [#allocation7], %s205
          %s208 = sshll.u32 [#allocation8], 4
          %s209 = int_to_ptr.vmem [resolvable:$true] %s208
          %211 = dma.hbm_to_vmem [thread:$0]  %s2, 128, %s209, [#allocation7]
        $region16: #{fwd.1} parent=11 // pred_fallthru
          _
        // Predicated region
        $region17: #{fwd.1} parent=11 // pred_check
          %p212 = pneg %p118
        $region18: #{fwd.1} parent=11 // pred_check_branch
          %214 = sbr.rel (%p212) target = $region20
        $region19: #{fwd.1} parent=11 // pred_region
          %s216 = ssub.s32 5120, 5120
          %217 = vsyncadd [#allocation10], %s216
          %s218 = sshll.u32 [#allocation9], 4
          %s219 = int_to_ptr.vmem [resolvable:$true] %s218
          %224 = dma.hbm_to_vmem [thread:$0]  %s3, 5120, %s219, [#allocation10], 128, 128, 8
        $region20: #{fwd.1} parent=11 // pred_fallthru
          _
        // Predicated region
        $region21: #{fwd.1} parent=11 // pred_check
          %p225 = pneg %p139
        $region22: #{fwd.1} parent=11 // pred_check_branch
          %227 = sbr.rel (%p225) target = $region24
        $region23: #{fwd.1} parent=11 // pred_region
          %s229 = ssub.s32 6144, 6144
          %230 = vsyncadd [#allocation10], %s229
          %s231 = sshll.u32 [#allocation11], 4
          %s232 = int_to_ptr.vmem [resolvable:$true] %s231
          %237 = dma.hbm_to_vmem [thread:$0]  %s4, 6144, %s232, [#allocation10], 1024, 1024, 64
        $region24: #{fwd.1} parent=11 // pred_fallthru
          _
      $region12: #{fwd.1} parent=5 // pred_fallthru
        _
      %p238 = scmp.lt.s32.totalorder %s24, 4
      // Predicated region
      $region25: #{fwd.1} parent=5 // pred_check
        %p239 = pneg %p238
      $region26: #{fwd.1} parent=5 // pred_check_branch
        %241 = sbr.rel (%p239) target = $region28
      $region27: #{fwd.1} parent=5 // pred_region
        // Predicated region
        $region29: #{fwd.1} parent=27 // pred_check
          %p242 = pneg %p44
        $region30: #{fwd.1} parent=27 // pred_check_branch
          %244 = sbr.rel (%p242) target = $region32
        $region31: #{fwd.1} parent=27 // pred_region
          %s245 = sand.u32 %s34, 1
          %s246 = scalar_lea.sflag [#allocation4], %s245
          %s247 = sand.u32 %s34, 1
          %s248 = smul.addr %s247, 8
          %s249 = scalar_lea.vmem [#allocation3], %s248
          %s251 = ssub.s32 128, 128
          %252 = vsyncadd %s246, %s251
          %s253 = smul.addr %s24, 128
          %s254 = scalar_lea.hbm %s0, %s253
          %s256 = sshll.u32 %s249, 4
          %s257 = int_to_ptr.vmem [resolvable:$true] %s256
          %259 = dma.hbm_to_vmem [thread:$0]  %s254, 128, %s257, %s246
        $region32: #{fwd.1} parent=27 // pred_fallthru
          _
        // Predicated region
        $region33: #{fwd.1} parent=27 // pred_check
          %p260 = pneg %p70
        $region34: #{fwd.1} parent=27 // pred_check_branch
          %262 = sbr.rel (%p260) target = $region36
        $region35: #{fwd.1} parent=27 // pred_region
          %s263 = sand.u32 %s24, 1
          %s264 = scalar_lea.sflag [#allocation7], %s263
          %s265 = sand.u32 %s60, 1
          %s266 = smul.addr %s265, 8
          %s267 = scalar_lea.vmem [#allocation6], %s266
          %s269 = ssub.s32 128, 128
          %270 = vsyncadd %s264, %s269
          %s271 = smul.addr %s24, 128
          %s272 = scalar_lea.hbm %s1, %s271
          %s274 = sshll.u32 %s267, 4
          %s275 = int_to_ptr.vmem [resolvable:$true] %s274
          %277 = dma.hbm_to_vmem [thread:$0]  %s272, 128, %s275, %s264
        $region36: #{fwd.1} parent=27 // pred_fallthru
          _
      $region28: #{fwd.1} parent=5 // pred_fallthru
        _
      %p278 = scmp.le.s32.totalorder 1, %s24
      %p279 = scmp.lt.s32.totalorder %s24, 5
      %p280 = pnand %p278, %p279
      %p281 = pneg %p280
      // Predicated region
      $region37: #{fwd.1} parent=5 // pred_check
        _
      $region38: #{fwd.1} parent=5 // pred_check_branch
        %283 = sbr.rel (%p280) target = $region40
      $region39: #{fwd.1} parent=5 // pred_region
        %s284 = ssub.s32 %s24, 1
        %s285 = sand.u32 %s37, 1
        %s286 = scalar_lea.sflag [#allocation4], %s285
        %s287 = sand.u32 %s37, 1
        %s288 = smul.addr %s287, 8
        %s289 = scalar_lea.vmem [#allocation3], %s288
        // Predicated region
        $region41: #{fwd.1} parent=39 // pred_check
          %p290 = pneg %p50
        $region42: #{fwd.1} parent=39 // pred_check_branch
          %292 = sbr.rel (%p290) target = $region44
        $region43: #{fwd.1} parent=39 // pred_region
          %293 = dma.done %s286, 128
        $region44: #{fwd.1} parent=39 // pred_fallthru
          _
        %s294 = sand.u32 %s29, 1
        %s295 = scalar_lea.sflag [#allocation7], %s294
        %s296 = sand.u32 %s63, 1
        %s297 = smul.addr %s296, 8
        %s298 = scalar_lea.vmem [#allocation6], %s297
        // Predicated region
        $region45: #{fwd.1} parent=39 // pred_check
          %p299 = pneg %p76
        $region46: #{fwd.1} parent=39 // pred_check_branch
          %301 = sbr.rel (%p299) target = $region48
        $region47: #{fwd.1} parent=39 // pred_region
          %302 = dma.done %s295, 128
        $region48: #{fwd.1} parent=39 // pred_fallthru
          _
        // Predicated region
        $region49: #{fwd.1} parent=39 // pred_check
          %p303 = pneg %p97
        $region50: #{fwd.1} parent=39 // pred_check_branch
          %305 = sbr.rel (%p303) target = $region52
        $region51: #{fwd.1} parent=39 // pred_region
          %306 = dma.done [#allocation7], 128
        $region52: #{fwd.1} parent=39 // pred_fallthru
          _
        // Predicated region
        $region53: #{fwd.1} parent=39 // pred_check
          %p307 = pneg %p118
        $region54: #{fwd.1} parent=39 // pred_check_branch
          %309 = sbr.rel (%p307) target = $region56
        $region55: #{fwd.1} parent=39 // pred_region
          %310 = dma.done [#allocation10], 5120
        $region56: #{fwd.1} parent=39 // pred_fallthru
          _
        // Predicated region
        $region57: #{fwd.1} parent=39 // pred_check
          %p311 = pneg %p139
        $region58: #{fwd.1} parent=39 // pred_check_branch
          %313 = sbr.rel (%p311) target = $region60
        $region59: #{fwd.1} parent=39 // pred_region
          %314 = dma.done [#allocation10], 6144
        $region60: #{fwd.1} parent=39 // pred_fallthru
          _
        %s315 = sand.u32 %s37, 1
        %s316 = scalar_lea.sflag [#allocation4], %s315
        %s317 = sand.u32 %s37, 1
        %s318 = smul.addr %s317, 8
        %s319 = scalar_lea.vmem [#allocation3], %s318
        %p320 = pneg %p50
        %p321 = pneg %p47
        %s322 = sand.u32 %s29, 1
        %s323 = scalar_lea.sflag [#allocation7], %s322
        %s324 = sand.u32 %s63, 1
        %s325 = smul.addr %s324, 8
        %s326 = scalar_lea.vmem [#allocation6], %s325
        %p327 = pneg %p76
        %p328 = pneg %p73
        %p329 = pneg %p97
        %p330 = pneg %p94
        %p331 = pneg %p118
        %p332 = pneg %p115
        %p333 = pneg %p139
        %p334 = pneg %p136
        %p335 = pneg %p165
        %p336 = pneg %p162
        %s337 = sand.u32 %s152, 1
        %s338 = scalar_lea.sflag [#allocation5], %s337
        %s339 = sand.u32 %s152, 1
        %s340 = smul.addr %s339, 8
        %s341 = scalar_lea.vmem [#allocation12], %s340
        %p342 = pneg %p186
        %p343 = pneg %p183
        %p345 = scmp.eq.s32.totalorder %s29, 0
        // Predicated region
        $region61: #{fwd.1} parent=39 // pred_check
          %p346 = pneg %p345
        $region62: #{fwd.1} parent=39 // pred_check_branch
          %348 = sbr.rel (%p346) target = $region64
        $region63: #{fwd.1} parent=39 // pred_region
          %v349 = vld [vmem:[#allocation8] sm:$0xff]
          %vm350 = vcmask 261120
          %351 = vst.msk [vmem:[#allocation2] sm:$0xff] %vm350, %v349
        $region64: #{fwd.1} parent=39 // pred_fallthru
          _
        %v352 = vld [vmem:[%s289] sm:$0xff]
        %v353 = vld [vmem:[#allocation9] sm:$0xff]
        %v354 = vld [vmem:[#allocation9 + $0x8] sm:$0xff]
        %v355 = vld [vmem:[#allocation9 + $0x10] sm:$0x1]
        %v356 = vlaneseq
        %v357 = vshrl.u32 %v356, 7
        %v358 = vsub.s32 0, %v357
        %v359 = vrot.slane %v355, %v358
        %vm360 = vcmask 130048
        %v362 = vsel %vm360, %v352, 0
        %364 = vmatprep.subr.mxu0 0.0
        %365 = vmatpush1.msra.mxu0 0.0
        %366 = vmatprep.subr.mxu0 0.0
        %367 = vmatpush1.msra.mxu0 0.0
        %368 = vmatprep.subr.mxu0 0.0
        %369 = vmatpush1.msra.mxu0 0.0
        %370 = vmatprep.subr.mxu0 0.0
        %371 = vmatpush1.msra.mxu0 0.0
        %372 = vmatprep.subr.mxu0 0.0
        %373 = vmatpush1.msra.mxu0 0.0
        %374 = vmatprep.subr.mxu0 0.0
        %375 = vmatpush1.msra.mxu0 0.0
        %376 = vmatprep.subr.mxu0 0.0
        %377 = vmatpush1.msra.mxu0 0.0
        %378 = vmatprep.subr.mxu0 0.0
        %379 = vmatpush1.msra.mxu0 0.0
        %380 = vmatprep.subr.mxu0 0.0
        %381 = vmatpush1.msra.mxu0 0.0
        %382 = vmatprep.subr.mxu0 0.0
        %383 = vmatpush1.msra.mxu0 0.0
        %384 = vmatprep.subr.mxu0 0.0
        %385 = vmatpush1.msra.mxu0 0.0
        %386 = vmatprep.subr.mxu0 0.0
        %387 = vmatpush1.msra.mxu0 0.0
        %388 = vmatprep.subr.mxu0 0.0
        %389 = vmatpush1.msra.mxu0 0.0
        %390 = vmatprep.subr.mxu0 0.0
        %391 = vmatpush1.msra.mxu0 0.0
        %392 = vmatprep.subr.mxu0 0.0
        %393 = vmatpush1.msra.mxu0 %v354
        %394 = vmatprep.subr.mxu0 0.0
        %395 = vmatpush1.msra.mxu0 %v353
        %396 = vmatprep.subr.mxu0 0.0
        %397 = vmatpush2.msra.mxu0 0.0
        %398 = vmatprep.subr.mxu0 0.0
        %399 = vmatpush2.msra.mxu0 0.0
        %400 = vmatprep.subr.mxu0 0.0
        %401 = vmatpush2.msra.mxu0 0.0
        %402 = vmatprep.subr.mxu0 0.0
        %403 = vmatpush2.msra.mxu0 0.0
        %404 = vmatprep.subr.mxu0 0.0
        %405 = vmatpush2.msra.mxu0 0.0
        %406 = vmatprep.subr.mxu0 0.0
        %407 = vmatpush2.msra.mxu0 0.0
        %408 = vmatprep.subr.mxu0 0.0
        %409 = vmatpush2.msra.mxu0 0.0
        %410 = vmatprep.subr.mxu0 0.0
        %411 = vmatpush2.msra.mxu0 0.0
        %412 = vmatprep.subr.mxu0 0.0
        %413 = vmatpush2.msra.mxu0 0.0
        %414 = vmatprep.subr.mxu0 0.0
        %415 = vmatpush2.msra.mxu0 0.0
        %416 = vmatprep.subr.mxu0 0.0
        %417 = vmatpush2.msra.mxu0 0.0
        %418 = vmatprep.subr.mxu0 0.0
        %419 = vmatpush2.msra.mxu0 0.0
        %420 = vmatprep.subr.mxu0 0.0
        %421 = vmatpush2.msra.mxu0 0.0
        %422 = vmatprep.subr.mxu0 0.0
        %423 = vmatpush2.msra.mxu0 0.0
        %424 = vmatprep.subr.mxu0 0.0
        %425 = vmatpush2.msra.mxu0 0.0
        %426 = vmatprep.subr.mxu0 0.0
        %427 = vmatpush2.msra.mxu0 0.0
        %428 = vmatprep.mubr.f32.mxu0 0.0
        %429 = vmatmul.mubr.f32.gmra.mxu0 %v362
        %v430 = vpop.f32.mrf.mxu0
        %v431 = vadd.f32 %v359, %v430
        %v432 = vpop.f32.mrf.mxu0
        %433 = vdwg.mxu0
        %v434 = vld [vmem:[#allocation9 + $0x18] sm:$0xff]
        %v435 = vld [vmem:[#allocation9 + $0x20] sm:$0xff]
        %v436 = vld [vmem:[#allocation9 + $0x28] sm:$0x1]
        %v437 = vlaneseq
        %v438 = vshrl.u32 %v437, 7
        %v439 = vsub.s32 0, %v438
        %v440 = vrot.slane %v436, %v439
        %v442 = vsel %vm360, %v431, 0
        %444 = vmatprep.subr.mxu0 0.0
        %445 = vmatpush1.msra.mxu0 0.0
        %446 = vmatprep.subr.mxu0 0.0
        %447 = vmatpush1.msra.mxu0 0.0
        %448 = vmatprep.subr.mxu0 0.0
        %449 = vmatpush1.msra.mxu0 0.0
        %450 = vmatprep.subr.mxu0 0.0
        %451 = vmatpush1.msra.mxu0 0.0
        %452 = vmatprep.subr.mxu0 0.0
        %453 = vmatpush1.msra.mxu0 0.0
        %454 = vmatprep.subr.mxu0 0.0
        %455 = vmatpush1.msra.mxu0 0.0
        %456 = vmatprep.subr.mxu0 0.0
        %457 = vmatpush1.msra.mxu0 0.0
        %458 = vmatprep.subr.mxu0 0.0
        %459 = vmatpush1.msra.mxu0 0.0
        %460 = vmatprep.subr.mxu0 0.0
        %461 = vmatpush1.msra.mxu0 0.0
        %462 = vmatprep.subr.mxu0 0.0
        %463 = vmatpush1.msra.mxu0 0.0
        %464 = vmatprep.subr.mxu0 0.0
        %465 = vmatpush1.msra.mxu0 0.0
        %466 = vmatprep.subr.mxu0 0.0
        %467 = vmatpush1.msra.mxu0 0.0
        %468 = vmatprep.subr.mxu0 0.0
        %469 = vmatpush1.msra.mxu0 0.0
        %470 = vmatprep.subr.mxu0 0.0
        %471 = vmatpush1.msra.mxu0 0.0
        %472 = vmatprep.subr.mxu0 0.0
        %473 = vmatpush1.msra.mxu0 %v435
        %474 = vmatprep.subr.mxu0 0.0
        %475 = vmatpush1.msra.mxu0 %v434
        %476 = vmatprep.subr.mxu0 0.0
        %477 = vmatpush2.msra.mxu0 0.0
        %478 = vmatprep.subr.mxu0 0.0
        %479 = vmatpush2.msra.mxu0 0.0
        %480 = vmatprep.subr.mxu0 0.0
        %481 = vmatpush2.msra.mxu0 0.0
        %482 = vmatprep.subr.mxu0 0.0
        %483 = vmatpush2.msra.mxu0 0.0
        %484 = vmatprep.subr.mxu0 0.0
        %485 = vmatpush2.msra.mxu0 0.0
        %486 = vmatprep.subr.mxu0 0.0
        %487 = vmatpush2.msra.mxu0 0.0
        %488 = vmatprep.subr.mxu0 0.0
        %489 = vmatpush2.msra.mxu0 0.0
        %490 = vmatprep.subr.mxu0 0.0
        %491 = vmatpush2.msra.mxu0 0.0
        %492 = vmatprep.subr.mxu0 0.0
        %493 = vmatpush2.msra.mxu0 0.0
        %494 = vmatprep.subr.mxu0 0.0
        %495 = vmatpush2.msra.mxu0 0.0
        %496 = vmatprep.subr.mxu0 0.0
        %497 = vmatpush2.msra.mxu0 0.0
        %498 = vmatprep.subr.mxu0 0.0
        %499 = vmatpush2.msra.mxu0 0.0
        %500 = vmatprep.subr.mxu0 0.0
        %501 = vmatpush2.msra.mxu0 0.0
        %502 = vmatprep.subr.mxu0 0.0
        %503 = vmatpush2.msra.mxu0 0.0
        %504 = vmatprep.subr.mxu0 0.0
        %505 = vmatpush2.msra.mxu0 0.0
        %506 = vmatprep.subr.mxu0 0.0
        %507 = vmatpush2.msra.mxu0 0.0
        %508 = vmatprep.mubr.f32.mxu0 0.0
        %509 = vmatmul.mubr.f32.gmra.mxu0 %v442
        %v510 = vpop.f32.mrf.mxu0
        %v511 = vadd.f32 %v440, %v510
        %v512 = vpop.f32.mrf.mxu0
        %513 = vdwg.mxu0
        %v514 = vld [vmem:[#allocation9 + $0xf8] sm:$0xff]
        %v515 = vld [vmem:[#allocation9 + $0x100] sm:$0xff]
        %v516 = vld [vmem:[#allocation9 + $0x108] sm:$0xff]
        %v517 = vld [vmem:[#allocation9 + $0x110] sm:$0xff]
        %v518 = vld [vmem:[#allocation9 + $0x118] sm:$0xff]
        %v519 = vld [vmem:[#allocation9 + $0x120] sm:$0xff]
        %v520 = vld [vmem:[#allocation9 + $0x128] sm:$0xff]
        %v521 = vld [vmem:[#allocation9 + $0x130] sm:$0xff]
        %v522 = vld [vmem:[#allocation9 + $0x138] sm:$0xff]
        %v523 = vmul.f32 %v511, %v514
        %v524 = vmul.f32 %v511, %v515
        %v525 = vmul.f32 %v511, %v516
        %v526 = vmul.f32 %v511, %v517
        %v527 = vmul.f32 %v511, %v518
        %v528 = vmul.f32 %v511, %v519
        %v529 = vmul.f32 %v511, %v520
        %v530 = vmul.f32 %v511, %v521
        %532 = vrot.lane.b32.xlu0 %v511, 112
        %v533 = vpop.permute.xlu0 %532
        %v535 = vsel %vm360, %v523, 0
        %v538 = vsel %vm360, %v524, 0
        %v541 = vsel %vm360, %v525, 0
        %v544 = vsel %vm360, %v526, 0
        %v547 = vsel %vm360, %v527, 0
        %v550 = vsel %vm360, %v528, 0
        %v553 = vsel %vm360, %v529, 0
        %v556 = vsel %vm360, %v530, 0
        %v558 = vsel %vm360, %v533, 0
        %560 = vmatprep.subr.mxu0 0.0
        %561 = vmatpush1.xpose.msra.mxu0 0.0
        %562 = vmatprep.subr.mxu0 0.0
        %563 = vmatpush1.xpose.msra.mxu0 0.0
        %564 = vmatprep.subr.mxu0 0.0
        %565 = vmatpush1.xpose.msra.mxu0 0.0
        %566 = vmatprep.subr.mxu0 0.0
        %567 = vmatpush1.xpose.msra.mxu0 0.0
        %568 = vmatprep.subr.mxu0 0.0
        %569 = vmatpush1.xpose.msra.mxu0 0.0
        %570 = vmatprep.subr.mxu0 0.0
        %571 = vmatpush1.xpose.msra.mxu0 0.0
        %572 = vmatprep.subr.mxu0 0.0
        %573 = vmatpush1.xpose.msra.mxu0 0.0
        %574 = vmatprep.subr.mxu0 0.0
        %575 = vmatpush1.xpose.msra.mxu0 0.0
        %576 = vmatprep.subr.mxu0 0.0
        %577 = vmatpush1.xpose.msra.mxu0 0.0
        %578 = vmatprep.subr.mxu0 0.0
        %579 = vmatpush1.xpose.msra.mxu0 0.0
        %580 = vmatprep.subr.mxu0 0.0
        %581 = vmatpush1.xpose.msra.mxu0 0.0
        %582 = vmatprep.subr.mxu0 0.0
        %583 = vmatpush1.xpose.msra.mxu0 0.0
        %584 = vmatprep.subr.mxu0 0.0
        %585 = vmatpush1.xpose.msra.mxu0 0.0
        %586 = vmatprep.subr.mxu0 0.0
        %587 = vmatpush1.xpose.msra.mxu0 0.0
        %588 = vmatprep.subr.mxu0 0.0
        %589 = vmatpush1.xpose.msra.mxu0 0.0
        %590 = vmatprep.subr.mxu0 0.0
        %591 = vmatpush1.xpose.msra.mxu0 %v558
        %592 = vmatprep.subr.mxu0 0.0
        %593 = vmatpush2.xpose.msra.mxu0 0.0
        %594 = vmatprep.subr.mxu0 0.0
        %595 = vmatpush2.xpose.msra.mxu0 0.0
        %596 = vmatprep.subr.mxu0 0.0
        %597 = vmatpush2.xpose.msra.mxu0 0.0
        %598 = vmatprep.subr.mxu0 0.0
        %599 = vmatpush2.xpose.msra.mxu0 0.0
        %600 = vmatprep.subr.mxu0 0.0
        %601 = vmatpush2.xpose.msra.mxu0 0.0
        %602 = vmatprep.subr.mxu0 0.0
        %603 = vmatpush2.xpose.msra.mxu0 0.0
        %604 = vmatprep.subr.mxu0 0.0
        %605 = vmatpush2.xpose.msra.mxu0 0.0
        %606 = vmatprep.subr.mxu0 0.0
        %607 = vmatpush2.xpose.msra.mxu0 0.0
        %608 = vmatprep.subr.mxu0 0.0
        %609 = vmatpush2.xpose.msra.mxu0 0.0
        %610 = vmatprep.subr.mxu0 0.0
        %611 = vmatpush2.xpose.msra.mxu0 0.0
        %612 = vmatprep.subr.mxu0 0.0
        %613 = vmatpush2.xpose.msra.mxu0 0.0
        %614 = vmatprep.subr.mxu0 0.0
        %615 = vmatpush2.xpose.msra.mxu0 0.0
        %616 = vmatprep.subr.mxu0 0.0
        %617 = vmatpush2.xpose.msra.mxu0 0.0
        %618 = vmatprep.subr.mxu0 0.0
        %619 = vmatpush2.xpose.msra.mxu0 0.0
        %620 = vmatprep.subr.mxu0 0.0
        %621 = vmatpush2.xpose.msra.mxu0 0.0
        %622 = vmatprep.subr.mxu0 0.0
        %623 = vmatpush2.xpose.msra.mxu0 0.0
        %624 = vmatprep.mubr.f32.mxu0 0.0
        %625 = vmatmul.mubr.f32.gmra.mxu0 %v535
        %v626 = vpop.f32.mrf.mxu0
        %v627 = vadd.f32 0.0, %v626
        %v628 = vpop.f32.mrf.mxu0
        %629 = vmatprep.mubr.f32.mxu0 0.0
        %630 = vmatmul.mubr.f32.gmra.mxu0 %v538
        %v631 = vpop.f32.mrf.mxu0
        %v632 = vadd.f32 0.0, %v631
        %v633 = vpop.f32.mrf.mxu0
        %634 = vmatprep.mubr.f32.mxu0 0.0
        %635 = vmatmul.mubr.f32.gmra.mxu0 %v541
        %v636 = vpop.f32.mrf.mxu0
        %v637 = vadd.f32 0.0, %v636
        %v638 = vpop.f32.mrf.mxu0
        %639 = vmatprep.mubr.f32.mxu0 0.0
        %640 = vmatmul.mubr.f32.gmra.mxu0 %v544
        %v641 = vpop.f32.mrf.mxu0
        %v642 = vadd.f32 0.0, %v641
        %v643 = vpop.f32.mrf.mxu0
        %644 = vmatprep.mubr.f32.mxu0 0.0
        %645 = vmatmul.mubr.f32.gmra.mxu0 %v547
        %v646 = vpop.f32.mrf.mxu0
        %v647 = vadd.f32 0.0, %v646
        %v648 = vpop.f32.mrf.mxu0
        %649 = vmatprep.mubr.f32.mxu0 0.0
        %650 = vmatmul.mubr.f32.gmra.mxu0 %v550
        %v651 = vpop.f32.mrf.mxu0
        %v652 = vadd.f32 0.0, %v651
        %v653 = vpop.f32.mrf.mxu0
        %654 = vmatprep.mubr.f32.mxu0 0.0
        %655 = vmatmul.mubr.f32.gmra.mxu0 %v553
        %v656 = vpop.f32.mrf.mxu0
        %v657 = vadd.f32 0.0, %v656
        %v658 = vpop.f32.mrf.mxu0
        %659 = vmatprep.mubr.f32.mxu0 0.0
        %660 = vmatmul.mubr.f32.gmra.mxu0 %v556
        %v661 = vpop.f32.mrf.mxu0
        %v662 = vadd.f32 0.0, %v661
        %v663 = vpop.f32.mrf.mxu0
        %664 = vdwg.mxu0
        %v665 = vmul.f32 %v627, 0.70710677
        %v666 = vmul.f32 %v632, 0.70710677
        %v667 = vmul.f32 %v637, 0.70710677
        %v668 = vmul.f32 %v642, 0.70710677
        %v669 = vmul.f32 %v647, 0.70710677
        %v670 = vmul.f32 %v652, 0.70710677
        %v671 = vmul.f32 %v657, 0.70710677
        %v672 = vmul.f32 %v662, 0.70710677
        %vm673 = vcmask 64512
        %v674 = vsel %vm673, %v665, -inf
        %675 = vmax.xlane.f32.xlu0 %v674
        %v676 = vpop.xlane.xlu0 %675
        %v677 = vsel %vm673, %v666, -inf
        %678 = vmax.xlane.f32.xlu0 %v677
        %v679 = vpop.xlane.xlu0 %678
        %v680 = vsel %vm673, %v667, -inf
        %681 = vmax.xlane.f32.xlu0 %v680
        %v682 = vpop.xlane.xlu0 %681
        %v683 = vsel %vm673, %v668, -inf
        %684 = vmax.xlane.f32.xlu0 %v683
        %v685 = vpop.xlane.xlu0 %684
        %v686 = vsel %vm673, %v669, -inf
        %687 = vmax.xlane.f32.xlu0 %v686
        %v688 = vpop.xlane.xlu0 %687
        %v689 = vsel %vm673, %v670, -inf
        %690 = vmax.xlane.f32.xlu0 %v689
        %v691 = vpop.xlane.xlu0 %690
        %v692 = vsel %vm673, %v671, -inf
        %693 = vmax.xlane.f32.xlu0 %v692
        %v694 = vpop.xlane.xlu0 %693
        %v695 = vsel %vm673, %v672, -inf
        %696 = vmax.xlane.f32.xlu0 %v695
        %v697 = vpop.xlane.xlu0 %696
        %v698 = vsub.f32 %v665, %v676
        %v699 = vsub.f32 %v666, %v679
        %v700 = vsub.f32 %v667, %v682
        %v701 = vsub.f32 %v668, %v685
        %v702 = vsub.f32 %v669, %v688
        %v703 = vsub.f32 %v670, %v691
        %v704 = vsub.f32 %v671, %v694
        %v705 = vsub.f32 %v672, %v697
        %v706 = vmul.f32 %v698, 1.442695
        %v707 = vpow.pop %v706
        %v708 = vmul.f32 %v699, 1.442695
        %v709 = vpow.pop %v708
        %v710 = vmul.f32 %v700, 1.442695
        %v711 = vpow.pop %v710
        %v712 = vmul.f32 %v701, 1.442695
        %v713 = vpow.pop %v712
        %v714 = vmul.f32 %v702, 1.442695
        %v715 = vpow.pop %v714
        %v716 = vmul.f32 %v703, 1.442695
        %v717 = vpow.pop %v716
        %v718 = vmul.f32 %v704, 1.442695
        %v719 = vpow.pop %v718
        %v720 = vmul.f32 %v705, 1.442695
        %v721 = vpow.pop %v720
        %v722 = vsel %vm673, %v707, 0.0
        %723 = vadd.xlane.f32.xlu0 %v722
        %v724 = vpop.xlane.xlu0 %723
        %v725 = vsel %vm673, %v709, 0.0
        %726 = vadd.xlane.f32.xlu0 %v725
        %v727 = vpop.xlane.xlu0 %726
        %v728 = vsel %vm673, %v711, 0.0
        %729 = vadd.xlane.f32.xlu0 %v728
        %v730 = vpop.xlane.xlu0 %729
        %v731 = vsel %vm673, %v713, 0.0
        %732 = vadd.xlane.f32.xlu0 %v731
        %v733 = vpop.xlane.xlu0 %732
        %v734 = vsel %vm673, %v715, 0.0
        %735 = vadd.xlane.f32.xlu0 %v734
        %v736 = vpop.xlane.xlu0 %735
        %v737 = vsel %vm673, %v717, 0.0
        %738 = vadd.xlane.f32.xlu0 %v737
        %v739 = vpop.xlane.xlu0 %738
        %v740 = vsel %vm673, %v719, 0.0
        %741 = vadd.xlane.f32.xlu0 %v740
        %v742 = vpop.xlane.xlu0 %741
        %v743 = vsel %vm673, %v721, 0.0
        %744 = vadd.xlane.f32.xlu0 %v743
        %v745 = vpop.xlane.xlu0 %744
        %v746 = vrcp.pop %v724
        %v747 = vrcp.pop %v727
        %v748 = vrcp.pop %v730
        %v749 = vrcp.pop %v733
        %v750 = vrcp.pop %v736
        %v751 = vrcp.pop %v739
        %v752 = vrcp.pop %v742
        %v753 = vrcp.pop %v745
        %v754 = vmul.f32 %v707, %v746
        %v755 = vmul.f32 %v709, %v747
        %v756 = vmul.f32 %v711, %v748
        %v757 = vmul.f32 %v713, %v749
        %v758 = vmul.f32 %v715, %v750
        %v759 = vmul.f32 %v717, %v751
        %v760 = vmul.f32 %v719, %v752
        %v761 = vmul.f32 %v721, %v753
        %762 = vrot.lane.b32.xlu0 %v511, 96
        %v763 = vpop.permute.xlu0 %762
        %v766 = vsel %vm673, %v754, 0
        %v769 = vsel %vm673, %v755, 0
        %v772 = vsel %vm673, %v756, 0
        %v775 = vsel %vm673, %v757, 0
        %v778 = vsel %vm673, %v758, 0
        %v781 = vsel %vm673, %v759, 0
        %v784 = vsel %vm673, %v760, 0
        %v787 = vsel %vm673, %v761, 0
        %789 = vmatprep.subr.mxu0 0.0
        %790 = vmatpush1.msra.mxu0 0.0
        %791 = vmatprep.subr.mxu0 0.0
        %792 = vmatpush1.msra.mxu0 0.0
        %793 = vmatprep.subr.mxu0 0.0
        %794 = vmatpush1.msra.mxu0 0.0
        %795 = vmatprep.subr.mxu0 0.0
        %796 = vmatpush1.msra.mxu0 0.0
        %797 = vmatprep.subr.mxu0 0.0
        %798 = vmatpush1.msra.mxu0 0.0
        %799 = vmatprep.subr.mxu0 0.0
        %800 = vmatpush1.msra.mxu0 0.0
        %801 = vmatprep.subr.mxu0 0.0
        %802 = vmatpush1.msra.mxu0 0.0
        %803 = vmatprep.subr.mxu0 0.0
        %804 = vmatpush1.msra.mxu0 0.0
        %805 = vmatprep.subr.mxu0 0.0
        %806 = vmatpush1.msra.mxu0 0.0
        %807 = vmatprep.subr.mxu0 0.0
        %808 = vmatpush1.msra.mxu0 0.0
        %809 = vmatprep.subr.mxu0 0.0
        %810 = vmatpush1.msra.mxu0 0.0
        %811 = vmatprep.subr.mxu0 0.0
        %812 = vmatpush1.msra.mxu0 0.0
        %813 = vmatprep.subr.mxu0 0.0
        %814 = vmatpush1.msra.mxu0 0.0
        %815 = vmatprep.subr.mxu0 0.0
        %816 = vmatpush1.msra.mxu0 0.0
        %817 = vmatprep.subr.mxu0 0.0
        %818 = vmatpush1.msra.mxu0 0.0
        %819 = vmatprep.subr.mxu0 0.0
        %820 = vmatpush1.msra.mxu0 %v763
        %821 = vmatprep.subr.mxu0 0.0
        %822 = vmatpush2.msra.mxu0 0.0
        %823 = vmatprep.subr.mxu0 0.0
        %824 = vmatpush2.msra.mxu0 0.0
        %825 = vmatprep.subr.mxu0 0.0
        %826 = vmatpush2.msra.mxu0 0.0
        %827 = vmatprep.subr.mxu0 0.0
        %828 = vmatpush2.msra.mxu0 0.0
        %829 = vmatprep.subr.mxu0 0.0
        %830 = vmatpush2.msra.mxu0 0.0
        %831 = vmatprep.subr.mxu0 0.0
        %832 = vmatpush2.msra.mxu0 0.0
        %833 = vmatprep.subr.mxu0 0.0
        %834 = vmatpush2.msra.mxu0 0.0
        %835 = vmatprep.subr.mxu0 0.0
        %836 = vmatpush2.msra.mxu0 0.0
        %837 = vmatprep.subr.mxu0 0.0
        %838 = vmatpush2.msra.mxu0 0.0
        %839 = vmatprep.subr.mxu0 0.0
        %840 = vmatpush2.msra.mxu0 0.0
        %841 = vmatprep.subr.mxu0 0.0
        %842 = vmatpush2.msra.mxu0 0.0
        %843 = vmatprep.subr.mxu0 0.0
        %844 = vmatpush2.msra.mxu0 0.0
        %845 = vmatprep.subr.mxu0 0.0
        %846 = vmatpush2.msra.mxu0 0.0
        %847 = vmatprep.subr.mxu0 0.0
        %848 = vmatpush2.msra.mxu0 0.0
        %849 = vmatprep.subr.mxu0 0.0
        %850 = vmatpush2.msra.mxu0 0.0
        %851 = vmatprep.subr.mxu0 0.0
        %852 = vmatpush2.msra.mxu0 0.0
        %853 = vmatprep.mubr.f32.mxu0 0.0
        %854 = vmatmul.mubr.f32.gmra.mxu0 %v766
        %v855 = vpop.f32.mrf.mxu0
        %v856 = vadd.f32 0.0, %v855
        %v857 = vpop.f32.mrf.mxu0
        %858 = vmatprep.mubr.f32.mxu0 0.0
        %859 = vmatmul.mubr.f32.gmra.mxu0 %v769
        %v860 = vpop.f32.mrf.mxu0
        %v861 = vadd.f32 0.0, %v860
        %v862 = vpop.f32.mrf.mxu0
        %863 = vmatprep.mubr.f32.mxu0 0.0
        %864 = vmatmul.mubr.f32.gmra.mxu0 %v772
        %v865 = vpop.f32.mrf.mxu0
        %v866 = vadd.f32 0.0, %v865
        %v867 = vpop.f32.mrf.mxu0
        %868 = vmatprep.mubr.f32.mxu0 0.0
        %869 = vmatmul.mubr.f32.gmra.mxu0 %v775
        %v870 = vpop.f32.mrf.mxu0
        %v871 = vadd.f32 0.0, %v870
        %v872 = vpop.f32.mrf.mxu0
        %873 = vmatprep.mubr.f32.mxu0 0.0
        %874 = vmatmul.mubr.f32.gmra.mxu0 %v778
        %v875 = vpop.f32.mrf.mxu0
        %v876 = vadd.f32 0.0, %v875
        %v877 = vpop.f32.mrf.mxu0
        %878 = vmatprep.mubr.f32.mxu0 0.0
        %879 = vmatmul.mubr.f32.gmra.mxu0 %v781
        %v880 = vpop.f32.mrf.mxu0
        %v881 = vadd.f32 0.0, %v880
        %v882 = vpop.f32.mrf.mxu0
        %883 = vmatprep.mubr.f32.mxu0 0.0
        %884 = vmatmul.mubr.f32.gmra.mxu0 %v784
        %v885 = vpop.f32.mrf.mxu0
        %v886 = vadd.f32 0.0, %v885
        %v887 = vpop.f32.mrf.mxu0
        %888 = vmatprep.mubr.f32.mxu0 0.0
        %889 = vmatmul.mubr.f32.gmra.mxu0 %v787
        %v890 = vpop.f32.mrf.mxu0
        %v891 = vadd.f32 0.0, %v890
        %v892 = vpop.f32.mrf.mxu0
        %893 = vdwg.mxu0
        %v894 = vmul.f32 %v856, %v514
        %v895 = vmul.f32 %v861, %v515
        %v896 = vmul.f32 %v866, %v516
        %v897 = vmul.f32 %v871, %v517
        %v898 = vmul.f32 %v876, %v518
        %v899 = vmul.f32 %v881, %v519
        %v900 = vmul.f32 %v886, %v520
        %v901 = vmul.f32 %v891, %v521
        %vm902 = vcmask 523264
        %v904 = vsel %vm902, %v522, 0
        %906 = vmatprep.subr.mxu0 0.0
        %907 = vmatpush1.msra.mxu0 0.0
        %908 = vmatprep.subr.mxu0 0.0
        %909 = vmatpush1.msra.mxu0 0.0
        %910 = vmatprep.subr.mxu0 0.0
        %911 = vmatpush1.msra.mxu0 0.0
        %912 = vmatprep.subr.mxu0 0.0
        %913 = vmatpush1.msra.mxu0 0.0
        %914 = vmatprep.subr.mxu0 0.0
        %915 = vmatpush1.msra.mxu0 0.0
        %916 = vmatprep.subr.mxu0 0.0
        %917 = vmatpush1.msra.mxu0 0.0
        %918 = vmatprep.subr.mxu0 0.0
        %919 = vmatpush1.msra.mxu0 0.0
        %920 = vmatprep.subr.mxu0 0.0
        %921 = vmatpush1.msra.mxu0 0.0
        %922 = vmatprep.subr.mxu0 0.0
        %923 = vmatpush1.msra.mxu0 %v901
        %924 = vmatprep.subr.mxu0 0.0
        %925 = vmatpush1.msra.mxu0 %v900
        %926 = vmatprep.subr.mxu0 0.0
        %927 = vmatpush1.msra.mxu0 %v899
        %928 = vmatprep.subr.mxu0 0.0
        %929 = vmatpush1.msra.mxu0 %v898
        %930 = vmatprep.subr.mxu0 0.0
        %931 = vmatpush1.msra.mxu0 %v897
        %932 = vmatprep.subr.mxu0 0.0
        %933 = vmatpush1.msra.mxu0 %v896
        %934 = vmatprep.subr.mxu0 0.0
        %935 = vmatpush1.msra.mxu0 %v895
        %936 = vmatprep.subr.mxu0 0.0
        %937 = vmatpush1.msra.mxu0 %v894
        %938 = vmatprep.subr.mxu0 0.0
        %939 = vmatpush2.msra.mxu0 0.0
        %940 = vmatprep.subr.mxu0 0.0
        %941 = vmatpush2.msra.mxu0 0.0
        %942 = vmatprep.subr.mxu0 0.0
        %943 = vmatpush2.msra.mxu0 0.0
        %944 = vmatprep.subr.mxu0 0.0
        %945 = vmatpush2.msra.mxu0 0.0
        %946 = vmatprep.subr.mxu0 0.0
        %947 = vmatpush2.msra.mxu0 0.0
        %948 = vmatprep.subr.mxu0 0.0
        %949 = vmatpush2.msra.mxu0 0.0
        %950 = vmatprep.subr.mxu0 0.0
        %951 = vmatpush2.msra.mxu0 0.0
        %952 = vmatprep.subr.mxu0 0.0
        %953 = vmatpush2.msra.mxu0 0.0
        %954 = vmatprep.subr.mxu0 0.0
        %955 = vmatpush2.msra.mxu0 0.0
        %956 = vmatprep.subr.mxu0 0.0
        %957 = vmatpush2.msra.mxu0 0.0
        %958 = vmatprep.subr.mxu0 0.0
        %959 = vmatpush2.msra.mxu0 0.0
        %960 = vmatprep.subr.mxu0 0.0
        %961 = vmatpush2.msra.mxu0 0.0
        %962 = vmatprep.subr.mxu0 0.0
        %963 = vmatpush2.msra.mxu0 0.0
        %964 = vmatprep.subr.mxu0 0.0
        %965 = vmatpush2.msra.mxu0 0.0
        %966 = vmatprep.subr.mxu0 0.0
        %967 = vmatpush2.msra.mxu0 0.0
        %968 = vmatprep.subr.mxu0 0.0
        %969 = vmatpush2.msra.mxu0 0.0
        %970 = vmatprep.mubr.f32.mxu0 0.0
        %971 = vmatmul.mubr.f32.gmra.mxu0 %v904
        %v972 = vpop.f32.mrf.mxu0
        %v973 = vadd.f32 0.0, %v972
        %v974 = vpop.f32.mrf.mxu0
        %975 = vdwg.mxu0
        %v976 = vld [vmem:[#allocation9 + $0x30] sm:$0xff]
        %v977 = vld [vmem:[#allocation9 + $0x38] sm:$0xff]
        %v978 = vld [vmem:[#allocation9 + $0x40] sm:$0x1]
        %v979 = vlaneseq
        %v980 = vshrl.u32 %v979, 7
        %v981 = vsub.s32 0, %v980
        %v982 = vrot.slane %v978, %v981
        %v984 = vsel %vm360, %v973, 0
        %986 = vmatprep.subr.mxu0 0.0
        %987 = vmatpush1.msra.mxu0 0.0
        %988 = vmatprep.subr.mxu0 0.0
        %989 = vmatpush1.msra.mxu0 0.0
        %990 = vmatprep.subr.mxu0 0.0
        %991 = vmatpush1.msra.mxu0 0.0
        %992 = vmatprep.subr.mxu0 0.0
        %993 = vmatpush1.msra.mxu0 0.0
        %994 = vmatprep.subr.mxu0 0.0
        %995 = vmatpush1.msra.mxu0 0.0
        %996 = vmatprep.subr.mxu0 0.0
        %997 = vmatpush1.msra.mxu0 0.0
        %998 = vmatprep.subr.mxu0 0.0
        %999 = vmatpush1.msra.mxu0 0.0
        %1000 = vmatprep.subr.mxu0 0.0
        %1001 = vmatpush1.msra.mxu0 0.0
        %1002 = vmatprep.subr.mxu0 0.0
        %1003 = vmatpush1.msra.mxu0 0.0
        %1004 = vmatprep.subr.mxu0 0.0
        %1005 = vmatpush1.msra.mxu0 0.0
        %1006 = vmatprep.subr.mxu0 0.0
        %1007 = vmatpush1.msra.mxu0 0.0
        %1008 = vmatprep.subr.mxu0 0.0
        %1009 = vmatpush1.msra.mxu0 0.0
        %1010 = vmatprep.subr.mxu0 0.0
        %1011 = vmatpush1.msra.mxu0 0.0
        %1012 = vmatprep.subr.mxu0 0.0
        %1013 = vmatpush1.msra.mxu0 0.0
        %1014 = vmatprep.subr.mxu0 0.0
        %1015 = vmatpush1.msra.mxu0 %v977
        %1016 = vmatprep.subr.mxu0 0.0
        %1017 = vmatpush1.msra.mxu0 %v976
        %1018 = vmatprep.subr.mxu0 0.0
        %1019 = vmatpush2.msra.mxu0 0.0
        %1020 = vmatprep.subr.mxu0 0.0
        %1021 = vmatpush2.msra.mxu0 0.0
        %1022 = vmatprep.subr.mxu0 0.0
        %1023 = vmatpush2.msra.mxu0 0.0
        %1024 = vmatprep.subr.mxu0 0.0
        %1025 = vmatpush2.msra.mxu0 0.0
        %1026 = vmatprep.subr.mxu0 0.0
        %1027 = vmatpush2.msra.mxu0 0.0
        %1028 = vmatprep.subr.mxu0 0.0
        %1029 = vmatpush2.msra.mxu0 0.0
        %1030 = vmatprep.subr.mxu0 0.0
        %1031 = vmatpush2.msra.mxu0 0.0
        %1032 = vmatprep.subr.mxu0 0.0
        %1033 = vmatpush2.msra.mxu0 0.0
        %1034 = vmatprep.subr.mxu0 0.0
        %1035 = vmatpush2.msra.mxu0 0.0
        %1036 = vmatprep.subr.mxu0 0.0
        %1037 = vmatpush2.msra.mxu0 0.0
        %1038 = vmatprep.subr.mxu0 0.0
        %1039 = vmatpush2.msra.mxu0 0.0
        %1040 = vmatprep.subr.mxu0 0.0
        %1041 = vmatpush2.msra.mxu0 0.0
        %1042 = vmatprep.subr.mxu0 0.0
        %1043 = vmatpush2.msra.mxu0 0.0
        %1044 = vmatprep.subr.mxu0 0.0
        %1045 = vmatpush2.msra.mxu0 0.0
        %1046 = vmatprep.subr.mxu0 0.0
        %1047 = vmatpush2.msra.mxu0 0.0
        %1048 = vmatprep.subr.mxu0 0.0
        %1049 = vmatpush2.msra.mxu0 0.0
        %1050 = vmatprep.mubr.f32.mxu0 0.0
        %1051 = vmatmul.mubr.f32.gmra.mxu0 %v984
        %v1052 = vpop.f32.mrf.mxu0
        %v1053 = vadd.f32 %v982, %v1052
        %v1054 = vpop.f32.mrf.mxu0
        %1055 = vdwg.mxu0
        %v1056 = vadd.f32 %v431, %v1053
        %v1057 = vld [vmem:[#allocation9 + $0x48] sm:$0x1]
        %v1058 = vld [vmem:[#allocation9 + $0x50] sm:$0x1]
        %v1059 = vsel %vm360, %v1056, 0.0
        %1060 = vadd.xlane.f32.xlu0 %v1059
        %v1061 = vpop.xlane.xlu0 %1060
        %v1062 = vrcp.pop 16.0
        %v1063 = vmul.f32 %v1061, %v1062
        %v1064 = vsub.f32 %v1056, %v1063
        %v1065 = vmul.f32 %v1064, %v1064
        %v1066 = vsel %vm360, %v1065, 0.0
        %1067 = vadd.xlane.f32.xlu0 %v1066
        %v1068 = vpop.xlane.xlu0 %1067
        %v1069 = vmul.f32 %v1068, %v1062
        %v1070 = vadd.f32 %v1069, 1e-05
        %v1071 = vrsqrt.pop %v1070
        %v1072 = vmul.f32 %v1064, %v1071
        %v1073 = vlaneseq
        %v1074 = vshrl.u32 %v1073, 7
        %v1075 = vsub.s32 0, %v1074
        %v1076 = vrot.slane %v1057, %v1075
        %v1077 = vmul.f32 %v1072, %v1076
        %v1078 = vlaneseq
        %v1079 = vshrl.u32 %v1078, 7
        %v1080 = vsub.s32 0, %v1079
        %v1081 = vrot.slane %v1058, %v1080
        %v1082 = vadd.f32 %v1077, %v1081
        %v1083 = vld [vmem:[#allocation11] sm:$0xff]
        %v1084 = vld [vmem:[#allocation11 + $0x8] sm:$0xff]
        %v1085 = vld [vmem:[#allocation11 + $0x10] sm:$0xff]
        %v1086 = vld [vmem:[#allocation11 + $0x18] sm:$0xff]
        %v1087 = vld [vmem:[#allocation11 + $0x20] sm:$0xff]
        %v1088 = vld [vmem:[#allocation11 + $0x28] sm:$0xff]
        %v1089 = vld [vmem:[#allocation11 + $0x30] sm:$0xff]
        %v1090 = vld [vmem:[#allocation11 + $0x38] sm:$0xff]
        %v1091 = vld [vmem:[#allocation11 + $0x40] sm:$0xff]
        %v1092 = vld [vmem:[#allocation11 + $0x48] sm:$0xff]
        %v1093 = vld [vmem:[#allocation11 + $0x50] sm:$0xff]
        %v1094 = vld [vmem:[#allocation11 + $0x58] sm:$0xff]
        %v1095 = vld [vmem:[#allocation11 + $0x60] sm:$0xff]
        %v1096 = vld [vmem:[#allocation11 + $0x68] sm:$0xff]
        %v1097 = vld [vmem:[#allocation11 + $0x70] sm:$0xff]
        %v1098 = vld [vmem:[#allocation11 + $0x78] sm:$0xff]
        %v1099 = vld [vmem:[#allocation11 + $0x80] sm:$0xff]
        %v1100 = vld [vmem:[#allocation11 + $0x88] sm:$0xff]
        %v1101 = vld [vmem:[#allocation11 + $0x90] sm:$0xff]
        %v1102 = vld [vmem:[#allocation11 + $0x98] sm:$0xff]
        %v1103 = vld [vmem:[#allocation11 + $0xa0] sm:$0xff]
        %v1104 = vld [vmem:[#allocation11 + $0xa8] sm:$0xff]
        %v1105 = vld [vmem:[#allocation11 + $0xb0] sm:$0xff]
        %v1106 = vld [vmem:[#allocation11 + $0xb8] sm:$0xff]
        %v1107 = vld [vmem:[#allocation11 + $0xc0] sm:$0xff]
        %v1108 = vld [vmem:[#allocation11 + $0xc8] sm:$0xff]
        %v1109 = vld [vmem:[#allocation11 + $0xd0] sm:$0xff]
        %v1110 = vld [vmem:[#allocation11 + $0xd8] sm:$0xff]
        %v1111 = vld [vmem:[#allocation11 + $0xe0] sm:$0xff]
        %v1112 = vld [vmem:[#allocation11 + $0xe8] sm:$0xff]
        %v1113 = vld [vmem:[#allocation11 + $0xf0] sm:$0xff]
        %v1114 = vld [vmem:[#allocation11 + $0xf8] sm:$0xff]
        %v1115 = vld [vmem:[#allocation11 + $0x100] sm:$0x11]
        %v1116 = vld [vmem:[#allocation11 + $0x108] sm:$0x11]
        %v1117 = vld [vmem:[#allocation11 + $0x110] sm:$0x11]
        %v1118 = vld [vmem:[#allocation11 + $0x118] sm:$0x11]
        %v1119 = vld [vmem:[#allocation11 + $0x120] sm:$0x11]
        %v1120 = vld [vmem:[#allocation11 + $0x128] sm:$0x11]
        %v1121 = vld [vmem:[#allocation11 + $0x130] sm:$0x11]
        %v1122 = vld [vmem:[#allocation11 + $0x138] sm:$0x11]
        %v1123 = vunpack.c.l.bf16 %v1115
        %v1124 = vunpack.c.h.bf16 %v1115
        %v1125 = vunpack.c.l.bf16 %v1116
        %v1126 = vunpack.c.h.bf16 %v1116
        %v1127 = vunpack.c.l.bf16 %v1117
        %v1128 = vunpack.c.h.bf16 %v1117
        %v1129 = vunpack.c.l.bf16 %v1118
        %v1130 = vunpack.c.h.bf16 %v1118
        %v1131 = vunpack.c.l.bf16 %v1119
        %v1132 = vunpack.c.h.bf16 %v1119
        %v1133 = vunpack.c.l.bf16 %v1120
        %v1134 = vunpack.c.h.bf16 %v1120
        %v1135 = vunpack.c.l.bf16 %v1121
        %v1136 = vunpack.c.h.bf16 %v1121
        %v1137 = vunpack.c.l.bf16 %v1122
        %v1138 = vunpack.c.h.bf16 %v1122
        %v1139 = vpack.c.bf16 %v1082, %v1082
        %v1140 = vlaneseq
        %v1141 = vshrl.u32 %v1140, 7
        %v1142 = vsub.s32 0, %v1141
        %v1143 = vrot.slane %v1123, %v1142
        %v1144 = vlaneseq
        %v1145 = vshrl.u32 %v1144, 7
        %v1146 = vsub.s32 0, %v1145
        %v1147 = vrot.slane %v1124, %v1146
        %v1148 = vlaneseq
        %v1149 = vshrl.u32 %v1148, 7
        %v1150 = vsub.s32 0, %v1149
        %v1151 = vrot.slane %v1125, %v1150
        %v1152 = vlaneseq
        %v1153 = vshrl.u32 %v1152, 7
        %v1154 = vsub.s32 0, %v1153
        %v1155 = vrot.slane %v1126, %v1154
        %v1156 = vlaneseq
        %v1157 = vshrl.u32 %v1156, 7
        %v1158 = vsub.s32 0, %v1157
        %v1159 = vrot.slane %v1127, %v1158
        %v1160 = vlaneseq
        %v1161 = vshrl.u32 %v1160, 7
        %v1162 = vsub.s32 0, %v1161
        %v1163 = vrot.slane %v1128, %v1162
        %v1164 = vlaneseq
        %v1165 = vshrl.u32 %v1164, 7
        %v1166 = vsub.s32 0, %v1165
        %v1167 = vrot.slane %v1129, %v1166
        %v1168 = vlaneseq
        %v1169 = vshrl.u32 %v1168, 7
        %v1170 = vsub.s32 0, %v1169
        %v1171 = vrot.slane %v1130, %v1170
        %v1172 = vlaneseq
        %v1173 = vshrl.u32 %v1172, 7
        %v1174 = vsub.s32 0, %v1173
        %v1175 = vrot.slane %v1131, %v1174
        %v1176 = vlaneseq
        %v1177 = vshrl.u32 %v1176, 7
        %v1178 = vsub.s32 0, %v1177
        %v1179 = vrot.slane %v1132, %v1178
        %v1180 = vlaneseq
        %v1181 = vshrl.u32 %v1180, 7
        %v1182 = vsub.s32 0, %v1181
        %v1183 = vrot.slane %v1133, %v1182
        %v1184 = vlaneseq
        %v1185 = vshrl.u32 %v1184, 7
        %v1186 = vsub.s32 0, %v1185
        %v1187 = vrot.slane %v1134, %v1186
        %v1188 = vlaneseq
        %v1189 = vshrl.u32 %v1188, 7
        %v1190 = vsub.s32 0, %v1189
        %v1191 = vrot.slane %v1135, %v1190
        %v1192 = vlaneseq
        %v1193 = vshrl.u32 %v1192, 7
        %v1194 = vsub.s32 0, %v1193
        %v1195 = vrot.slane %v1136, %v1194
        %v1196 = vlaneseq
        %v1197 = vshrl.u32 %v1196, 7
        %v1198 = vsub.s32 0, %v1197
        %v1199 = vrot.slane %v1137, %v1198
        %v1200 = vlaneseq
        %v1201 = vshrl.u32 %v1200, 7
        %v1202 = vsub.s32 0, %v1201
        %v1203 = vrot.slane %v1138, %v1202
        %v1220 = vunpack.c.l.b16 %v1083
        %v1221 = vunpack.c.h.b16 %v1083
        %v1222 = vunpack.c.l.b16 %v1084
        %v1223 = vunpack.c.h.b16 %v1084
        %v1224 = vunpack.c.l.b16 %v1085
        %v1225 = vunpack.c.h.b16 %v1085
        %v1226 = vunpack.c.l.b16 %v1086
        %v1227 = vunpack.c.h.b16 %v1086
        %v1228 = vunpack.c.l.b16 %v1087
        %v1229 = vunpack.c.h.b16 %v1087
        %v1230 = vunpack.c.l.b16 %v1088
        %v1231 = vunpack.c.h.b16 %v1088
        %v1232 = vunpack.c.l.b16 %v1089
        %v1233 = vunpack.c.h.b16 %v1089
        %v1234 = vunpack.c.l.b16 %v1090
        %v1235 = vunpack.c.h.b16 %v1090
        %v1236 = vunpack.c.l.b16 %v1091
        %v1237 = vunpack.c.h.b16 %v1091
        %v1238 = vunpack.c.l.b16 %v1092
        %v1239 = vunpack.c.h.b16 %v1092
        %v1240 = vunpack.c.l.b16 %v1093
        %v1241 = vunpack.c.h.b16 %v1093
        %v1242 = vunpack.c.l.b16 %v1094
        %v1243 = vunpack.c.h.b16 %v1094
        %v1244 = vunpack.c.l.b16 %v1095
        %v1245 = vunpack.c.h.b16 %v1095
        %v1246 = vunpack.c.l.b16 %v1096
        %v1247 = vunpack.c.h.b16 %v1096
        %v1248 = vunpack.c.l.b16 %v1097
        %v1249 = vunpack.c.h.b16 %v1097
        %v1250 = vunpack.c.l.b16 %v1098
        %v1251 = vunpack.c.h.b16 %v1098
        %v1252 = vpack.c.b16 %v1236, %v1220
        %v1253 = vpack.c.b16 %v1237, %v1221
        %v1254 = vpack.c.b16 %v1238, %v1222
        %v1255 = vpack.c.b16 %v1239, %v1223
        %v1256 = vpack.c.b16 %v1240, %v1224
        %v1257 = vpack.c.b16 %v1241, %v1225
        %v1258 = vpack.c.b16 %v1242, %v1226
        %v1259 = vpack.c.b16 %v1243, %v1227
        %v1260 = vpack.c.b16 %v1244, %v1228
        %v1261 = vpack.c.b16 %v1245, %v1229
        %v1262 = vpack.c.b16 %v1246, %v1230
        %v1263 = vpack.c.b16 %v1247, %v1231
        %v1264 = vpack.c.b16 %v1248, %v1232
        %v1265 = vpack.c.b16 %v1249, %v1233
        %v1266 = vpack.c.b16 %v1250, %v1234
        %v1267 = vpack.c.b16 %v1251, %v1235
        %v1285 = vsel %vm360, %v1139, 0
        %1287 = vmatprep.subr.bf16.mxu0 0
        %1288 = vmatpush1.bf16.msra.mxu0 0
        %1289 = vmatprep.subr.bf16.mxu0 0
        %1290 = vmatpush1.bf16.msra.mxu0 0
        %1291 = vmatprep.subr.bf16.mxu0 0
        %1292 = vmatpush1.bf16.msra.mxu0 0
        %1293 = vmatprep.subr.bf16.mxu0 0
        %1294 = vmatpush1.bf16.msra.mxu0 0
        %1295 = vmatprep.subr.bf16.mxu0 0
        %1296 = vmatpush1.bf16.msra.mxu0 0
        %1297 = vmatprep.subr.bf16.mxu0 0
        %1298 = vmatpush1.bf16.msra.mxu0 0
        %1299 = vmatprep.subr.bf16.mxu0 0
        %1300 = vmatpush1.bf16.msra.mxu0 0
        %1301 = vmatprep.subr.bf16.mxu0 %v1253
        %1302 = vmatpush1.bf16.msra.mxu0 %v1252
        %1303 = vmatprep.subr.bf16.mxu0 0
        %1304 = vmatpush2.bf16.msra.mxu0 0
        %1305 = vmatprep.subr.bf16.mxu0 0
        %1306 = vmatpush2.bf16.msra.mxu0 0
        %1307 = vmatprep.subr.bf16.mxu0 0
        %1308 = vmatpush2.bf16.msra.mxu0 0
        %1309 = vmatprep.subr.bf16.mxu0 0
        %1310 = vmatpush2.bf16.msra.mxu0 0
        %1311 = vmatprep.subr.bf16.mxu0 0
        %1312 = vmatpush2.bf16.msra.mxu0 0
        %1313 = vmatprep.subr.bf16.mxu0 0
        %1314 = vmatpush2.bf16.msra.mxu0 0
        %1315 = vmatprep.subr.bf16.mxu0 0
        %1316 = vmatpush2.bf16.msra.mxu0 0
        %1317 = vmatprep.subr.bf16.mxu0 0
        %1318 = vmatpush2.bf16.msra.mxu0 0
        %1319 = vmatprep.mubr.bf16.mxu0 0
        %1320 = vmatmul.mubr.bf16.gmra.mxu0 %v1285
        %v1321 = vpop.f32.mrf.mxu0
        %v1322 = vadd.f32 %v1143, %v1321
        %v1323 = vpop.f32.mrf.mxu0
        %v1324 = vadd.f32 %v1147, %v1323
        %v1325 = vpop.f32.mrf.mxu0
        %v1326 = vpop.f32.mrf.mxu0
        %1327 = vdwg.mxu0
        %1328 = vmatprep.subr.bf16.mxu0 0
        %1329 = vmatpush1.bf16.msra.mxu0 0
        %1330 = vmatprep.subr.bf16.mxu0 0
        %1331 = vmatpush1.bf16.msra.mxu0 0
        %1332 = vmatprep.subr.bf16.mxu0 0
        %1333 = vmatpush1.bf16.msra.mxu0 0
        %1334 = vmatprep.subr.bf16.mxu0 0
        %1335 = vmatpush1.bf16.msra.mxu0 0
        %1336 = vmatprep.subr.bf16.mxu0 0
        %1337 = vmatpush1.bf16.msra.mxu0 0
        %1338 = vmatprep.subr.bf16.mxu0 0
        %1339 = vmatpush1.bf16.msra.mxu0 0
        %1340 = vmatprep.subr.bf16.mxu0 0
        %1341 = vmatpush1.bf16.msra.mxu0 0
        %1342 = vmatprep.subr.bf16.mxu0 %v1255
        %1343 = vmatpush1.bf16.msra.mxu0 %v1254
        %1344 = vmatprep.subr.bf16.mxu0 0
        %1345 = vmatpush2.bf16.msra.mxu0 0
        %1346 = vmatprep.subr.bf16.mxu0 0
        %1347 = vmatpush2.bf16.msra.mxu0 0
        %1348 = vmatprep.subr.bf16.mxu0 0
        %1349 = vmatpush2.bf16.msra.mxu0 0
        %1350 = vmatprep.subr.bf16.mxu0 0
        %1351 = vmatpush2.bf16.msra.mxu0 0
        %1352 = vmatprep.subr.bf16.mxu0 0
        %1353 = vmatpush2.bf16.msra.mxu0 0
        %1354 = vmatprep.subr.bf16.mxu0 0
        %1355 = vmatpush2.bf16.msra.mxu0 0
        %1356 = vmatprep.subr.bf16.mxu0 0
        %1357 = vmatpush2.bf16.msra.mxu0 0
        %1358 = vmatprep.subr.bf16.mxu0 0
        %1359 = vmatpush2.bf16.msra.mxu0 0
        %1360 = vmatprep.mubr.bf16.mxu0 0
        %1361 = vmatmul.mubr.bf16.gmra.mxu0 %v1285
        %v1362 = vpop.f32.mrf.mxu0
        %v1363 = vadd.f32 %v1151, %v1362
        %v1364 = vpop.f32.mrf.mxu0
        %v1365 = vadd.f32 %v1155, %v1364
        %v1366 = vpop.f32.mrf.mxu0
        %v1367 = vpop.f32.mrf.mxu0
        %1368 = vdwg.mxu0
        %1369 = vmatprep.subr.bf16.mxu0 0
        %1370 = vmatpush1.bf16.msra.mxu0 0
        %1371 = vmatprep.subr.bf16.mxu0 0
        %1372 = vmatpush1.bf16.msra.mxu0 0
        %1373 = vmatprep.subr.bf16.mxu0 0
        %1374 = vmatpush1.bf16.msra.mxu0 0
        %1375 = vmatprep.subr.bf16.mxu0 0
        %1376 = vmatpush1.bf16.msra.mxu0 0
        %1377 = vmatprep.subr.bf16.mxu0 0
        %1378 = vmatpush1.bf16.msra.mxu0 0
        %1379 = vmatprep.subr.bf16.mxu0 0
        %1380 = vmatpush1.bf16.msra.mxu0 0
        %1381 = vmatprep.subr.bf16.mxu0 0
        %1382 = vmatpush1.bf16.msra.mxu0 0
        %1383 = vmatprep.subr.bf16.mxu0 %v1257
        %1384 = vmatpush1.bf16.msra.mxu0 %v1256
        %1385 = vmatprep.subr.bf16.mxu0 0
        %1386 = vmatpush2.bf16.msra.mxu0 0
        %1387 = vmatprep.subr.bf16.mxu0 0
        %1388 = vmatpush2.bf16.msra.mxu0 0
        %1389 = vmatprep.subr.bf16.mxu0 0
        %1390 = vmatpush2.bf16.msra.mxu0 0
        %1391 = vmatprep.subr.bf16.mxu0 0
        %1392 = vmatpush2.bf16.msra.mxu0 0
        %1393 = vmatprep.subr.bf16.mxu0 0
        %1394 = vmatpush2.bf16.msra.mxu0 0
        %1395 = vmatprep.subr.bf16.mxu0 0
        %1396 = vmatpush2.bf16.msra.mxu0 0
        %1397 = vmatprep.subr.bf16.mxu0 0
        %1398 = vmatpush2.bf16.msra.mxu0 0
        %1399 = vmatprep.subr.bf16.mxu0 0
        %1400 = vmatpush2.bf16.msra.mxu0 0
        %1401 = vmatprep.mubr.bf16.mxu0 0
        %1402 = vmatmul.mubr.bf16.gmra.mxu0 %v1285
        %v1403 = vpop.f32.mrf.mxu0
        %v1404 = vadd.f32 %v1159, %v1403
        %v1405 = vpop.f32.mrf.mxu0
        %v1406 = vadd.f32 %v1163, %v1405
        %v1407 = vpop.f32.mrf.mxu0
        %v1408 = vpop.f32.mrf.mxu0
        %1409 = vdwg.mxu0
        %1410 = vmatprep.subr.bf16.mxu0 0
        %1411 = vmatpush1.bf16.msra.mxu0 0
        %1412 = vmatprep.subr.bf16.mxu0 0
        %1413 = vmatpush1.bf16.msra.mxu0 0
        %1414 = vmatprep.subr.bf16.mxu0 0
        %1415 = vmatpush1.bf16.msra.mxu0 0
        %1416 = vmatprep.subr.bf16.mxu0 0
        %1417 = vmatpush1.bf16.msra.mxu0 0
        %1418 = vmatprep.subr.bf16.mxu0 0
        %1419 = vmatpush1.bf16.msra.mxu0 0
        %1420 = vmatprep.subr.bf16.mxu0 0
        %1421 = vmatpush1.bf16.msra.mxu0 0
        %1422 = vmatprep.subr.bf16.mxu0 0
        %1423 = vmatpush1.bf16.msra.mxu0 0
        %1424 = vmatprep.subr.bf16.mxu0 %v1259
        %1425 = vmatpush1.bf16.msra.mxu0 %v1258
        %1426 = vmatprep.subr.bf16.mxu0 0
        %1427 = vmatpush2.bf16.msra.mxu0 0
        %1428 = vmatprep.subr.bf16.mxu0 0
        %1429 = vmatpush2.bf16.msra.mxu0 0
        %1430 = vmatprep.subr.bf16.mxu0 0
        %1431 = vmatpush2.bf16.msra.mxu0 0
        %1432 = vmatprep.subr.bf16.mxu0 0
        %1433 = vmatpush2.bf16.msra.mxu0 0
        %1434 = vmatprep.subr.bf16.mxu0 0
        %1435 = vmatpush2.bf16.msra.mxu0 0
        %1436 = vmatprep.subr.bf16.mxu0 0
        %1437 = vmatpush2.bf16.msra.mxu0 0
        %1438 = vmatprep.subr.bf16.mxu0 0
        %1439 = vmatpush2.bf16.msra.mxu0 0
        %1440 = vmatprep.subr.bf16.mxu0 0
        %1441 = vmatpush2.bf16.msra.mxu0 0
        %1442 = vmatprep.mubr.bf16.mxu0 0
        %1443 = vmatmul.mubr.bf16.gmra.mxu0 %v1285
        %v1444 = vpop.f32.mrf.mxu0
        %v1445 = vadd.f32 %v1167, %v1444
        %v1446 = vpop.f32.mrf.mxu0
        %v1447 = vadd.f32 %v1171, %v1446
        %v1448 = vpop.f32.mrf.mxu0
        %v1449 = vpop.f32.mrf.mxu0
        %1450 = vdwg.mxu0
        %1451 = vmatprep.subr.bf16.mxu0 0
        %1452 = vmatpush1.bf16.msra.mxu0 0
        %1453 = vmatprep.subr.bf16.mxu0 0
        %1454 = vmatpush1.bf16.msra.mxu0 0
        %1455 = vmatprep.subr.bf16.mxu0 0
        %1456 = vmatpush1.bf16.msra.mxu0 0
        %1457 = vmatprep.subr.bf16.mxu0 0
        %1458 = vmatpush1.bf16.msra.mxu0 0
        %1459 = vmatprep.subr.bf16.mxu0 0
        %1460 = vmatpush1.bf16.msra.mxu0 0
        %1461 = vmatprep.subr.bf16.mxu0 0
        %1462 = vmatpush1.bf16.msra.mxu0 0
        %1463 = vmatprep.subr.bf16.mxu0 0
        %1464 = vmatpush1.bf16.msra.mxu0 0
        %1465 = vmatprep.subr.bf16.mxu0 %v1261
        %1466 = vmatpush1.bf16.msra.mxu0 %v1260
        %1467 = vmatprep.subr.bf16.mxu0 0
        %1468 = vmatpush2.bf16.msra.mxu0 0
        %1469 = vmatprep.subr.bf16.mxu0 0
        %1470 = vmatpush2.bf16.msra.mxu0 0
        %1471 = vmatprep.subr.bf16.mxu0 0
        %1472 = vmatpush2.bf16.msra.mxu0 0
        %1473 = vmatprep.subr.bf16.mxu0 0
        %1474 = vmatpush2.bf16.msra.mxu0 0
        %1475 = vmatprep.subr.bf16.mxu0 0
        %1476 = vmatpush2.bf16.msra.mxu0 0
        %1477 = vmatprep.subr.bf16.mxu0 0
        %1478 = vmatpush2.bf16.msra.mxu0 0
        %1479 = vmatprep.subr.bf16.mxu0 0
        %1480 = vmatpush2.bf16.msra.mxu0 0
        %1481 = vmatprep.subr.bf16.mxu0 0
        %1482 = vmatpush2.bf16.msra.mxu0 0
        %1483 = vmatprep.mubr.bf16.mxu0 0
        %1484 = vmatmul.mubr.bf16.gmra.mxu0 %v1285
        %v1485 = vpop.f32.mrf.mxu0
        %v1486 = vadd.f32 %v1175, %v1485
        %v1487 = vpop.f32.mrf.mxu0
        %v1488 = vadd.f32 %v1179, %v1487
        %v1489 = vpop.f32.mrf.mxu0
        %v1490 = vpop.f32.mrf.mxu0
        %1491 = vdwg.mxu0
        %1492 = vmatprep.subr.bf16.mxu0 0
        %1493 = vmatpush1.bf16.msra.mxu0 0
        %1494 = vmatprep.subr.bf16.mxu0 0
        %1495 = vmatpush1.bf16.msra.mxu0 0
        %1496 = vmatprep.subr.bf16.mxu0 0
        %1497 = vmatpush1.bf16.msra.mxu0 0
        %1498 = vmatprep.subr.bf16.mxu0 0
        %1499 = vmatpush1.bf16.msra.mxu0 0
        %1500 = vmatprep.subr.bf16.mxu0 0
        %1501 = vmatpush1.bf16.msra.mxu0 0
        %1502 = vmatprep.subr.bf16.mxu0 0
        %1503 = vmatpush1.bf16.msra.mxu0 0
        %1504 = vmatprep.subr.bf16.mxu0 0
        %1505 = vmatpush1.bf16.msra.mxu0 0
        %1506 = vmatprep.subr.bf16.mxu0 %v1263
        %1507 = vmatpush1.bf16.msra.mxu0 %v1262
        %1508 = vmatprep.subr.bf16.mxu0 0
        %1509 = vmatpush2.bf16.msra.mxu0 0
        %1510 = vmatprep.subr.bf16.mxu0 0
        %1511 = vmatpush2.bf16.msra.mxu0 0
        %1512 = vmatprep.subr.bf16.mxu0 0
        %1513 = vmatpush2.bf16.msra.mxu0 0
        %1514 = vmatprep.subr.bf16.mxu0 0
        %1515 = vmatpush2.bf16.msra.mxu0 0
        %1516 = vmatprep.subr.bf16.mxu0 0
        %1517 = vmatpush2.bf16.msra.mxu0 0
        %1518 = vmatprep.subr.bf16.mxu0 0
        %1519 = vmatpush2.bf16.msra.mxu0 0
        %1520 = vmatprep.subr.bf16.mxu0 0
        %1521 = vmatpush2.bf16.msra.mxu0 0
        %1522 = vmatprep.subr.bf16.mxu0 0
        %1523 = vmatpush2.bf16.msra.mxu0 0
        %1524 = vmatprep.mubr.bf16.mxu0 0
        %1525 = vmatmul.mubr.bf16.gmra.mxu0 %v1285
        %v1526 = vpop.f32.mrf.mxu0
        %v1527 = vadd.f32 %v1183, %v1526
        %v1528 = vpop.f32.mrf.mxu0
        %v1529 = vadd.f32 %v1187, %v1528
        %v1530 = vpop.f32.mrf.mxu0
        %v1531 = vpop.f32.mrf.mxu0
        %1532 = vdwg.mxu0
        %1533 = vmatprep.subr.bf16.mxu0 0
        %1534 = vmatpush1.bf16.msra.mxu0 0
        %1535 = vmatprep.subr.bf16.mxu0 0
        %1536 = vmatpush1.bf16.msra.mxu0 0
        %1537 = vmatprep.subr.bf16.mxu0 0
        %1538 = vmatpush1.bf16.msra.mxu0 0
        %1539 = vmatprep.subr.bf16.mxu0 0
        %1540 = vmatpush1.bf16.msra.mxu0 0
        %1541 = vmatprep.subr.bf16.mxu0 0
        %1542 = vmatpush1.bf16.msra.mxu0 0
        %1543 = vmatprep.subr.bf16.mxu0 0
        %1544 = vmatpush1.bf16.msra.mxu0 0
        %1545 = vmatprep.subr.bf16.mxu0 0
        %1546 = vmatpush1.bf16.msra.mxu0 0
        %1547 = vmatprep.subr.bf16.mxu0 %v1265
        %1548 = vmatpush1.bf16.msra.mxu0 %v1264
        %1549 = vmatprep.subr.bf16.mxu0 0
        %1550 = vmatpush2.bf16.msra.mxu0 0
        %1551 = vmatprep.subr.bf16.mxu0 0
        %1552 = vmatpush2.bf16.msra.mxu0 0
        %1553 = vmatprep.subr.bf16.mxu0 0
        %1554 = vmatpush2.bf16.msra.mxu0 0
        %1555 = vmatprep.subr.bf16.mxu0 0
        %1556 = vmatpush2.bf16.msra.mxu0 0
        %1557 = vmatprep.subr.bf16.mxu0 0
        %1558 = vmatpush2.bf16.msra.mxu0 0
        %1559 = vmatprep.subr.bf16.mxu0 0
        %1560 = vmatpush2.bf16.msra.mxu0 0
        %1561 = vmatprep.subr.bf16.mxu0 0
        %1562 = vmatpush2.bf16.msra.mxu0 0
        %1563 = vmatprep.subr.bf16.mxu0 0
        %1564 = vmatpush2.bf16.msra.mxu0 0
        %1565 = vmatprep.mubr.bf16.mxu0 0
        %1566 = vmatmul.mubr.bf16.gmra.mxu0 %v1285
        %v1567 = vpop.f32.mrf.mxu0
        %v1568 = vadd.f32 %v1191, %v1567
        %v1569 = vpop.f32.mrf.mxu0
        %v1570 = vadd.f32 %v1195, %v1569
        %v1571 = vpop.f32.mrf.mxu0
        %v1572 = vpop.f32.mrf.mxu0
        %1573 = vdwg.mxu0
        %1574 = vmatprep.subr.bf16.mxu0 0
        %1575 = vmatpush1.bf16.msra.mxu0 0
        %1576 = vmatprep.subr.bf16.mxu0 0
        %1577 = vmatpush1.bf16.msra.mxu0 0
        %1578 = vmatprep.subr.bf16.mxu0 0
        %1579 = vmatpush1.bf16.msra.mxu0 0
        %1580 = vmatprep.subr.bf16.mxu0 0
        %1581 = vmatpush1.bf16.msra.mxu0 0
        %1582 = vmatprep.subr.bf16.mxu0 0
        %1583 = vmatpush1.bf16.msra.mxu0 0
        %1584 = vmatprep.subr.bf16.mxu0 0
        %1585 = vmatpush1.bf16.msra.mxu0 0
        %1586 = vmatprep.subr.bf16.mxu0 0
        %1587 = vmatpush1.bf16.msra.mxu0 0
        %1588 = vmatprep.subr.bf16.mxu0 %v1267
        %1589 = vmatpush1.bf16.msra.mxu0 %v1266
        %1590 = vmatprep.subr.bf16.mxu0 0
        %1591 = vmatpush2.bf16.msra.mxu0 0
        %1592 = vmatprep.subr.bf16.mxu0 0
        %1593 = vmatpush2.bf16.msra.mxu0 0
        %1594 = vmatprep.subr.bf16.mxu0 0
        %1595 = vmatpush2.bf16.msra.mxu0 0
        %1596 = vmatprep.subr.bf16.mxu0 0
        %1597 = vmatpush2.bf16.msra.mxu0 0
        %1598 = vmatprep.subr.bf16.mxu0 0
        %1599 = vmatpush2.bf16.msra.mxu0 0
        %1600 = vmatprep.subr.bf16.mxu0 0
        %1601 = vmatpush2.bf16.msra.mxu0 0
        %1602 = vmatprep.subr.bf16.mxu0 0
        %1603 = vmatpush2.bf16.msra.mxu0 0
        %1604 = vmatprep.subr.bf16.mxu0 0
        %1605 = vmatpush2.bf16.msra.mxu0 0
        %1606 = vmatprep.mubr.bf16.mxu0 0
        %1607 = vmatmul.mubr.bf16.gmra.mxu0 %v1285
        %v1608 = vpop.f32.mrf.mxu0
        %v1609 = vadd.f32 %v1199, %v1608
        %v1610 = vpop.f32.mrf.mxu0
        %v1611 = vadd.f32 %v1203, %v1610
        %v1612 = vpop.f32.mrf.mxu0
        %v1613 = vpop.f32.mrf.mxu0
        %1614 = vdwg.mxu0
        %v1615 = vmax.f32 %v1322, 0.0
        %v1616 = vmax.f32 %v1324, 0.0
        %v1617 = vmax.f32 %v1363, 0.0
        %v1618 = vmax.f32 %v1365, 0.0
        %v1619 = vmax.f32 %v1404, 0.0
        %v1620 = vmax.f32 %v1406, 0.0
        %v1621 = vmax.f32 %v1445, 0.0
        %v1622 = vmax.f32 %v1447, 0.0
        %v1623 = vmax.f32 %v1486, 0.0
        %v1624 = vmax.f32 %v1488, 0.0
        %v1625 = vmax.f32 %v1527, 0.0
        %v1626 = vmax.f32 %v1529, 0.0
        %v1627 = vmax.f32 %v1568, 0.0
        %v1628 = vmax.f32 %v1570, 0.0
        %v1629 = vmax.f32 %v1609, 0.0
        %v1630 = vmax.f32 %v1611, 0.0
        %v1631 = vpack.c.bf16 %v1615, %v1615
        %v1632 = vpack.c.bf16 %v1616, %v1616
        %v1633 = vpack.c.bf16 %v1617, %v1617
        %v1634 = vpack.c.bf16 %v1618, %v1618
        %v1635 = vpack.c.bf16 %v1619, %v1619
        %v1636 = vpack.c.bf16 %v1620, %v1620
        %v1637 = vpack.c.bf16 %v1621, %v1621
        %v1638 = vpack.c.bf16 %v1622, %v1622
        %v1639 = vpack.c.bf16 %v1623, %v1623
        %v1640 = vpack.c.bf16 %v1624, %v1624
        %v1641 = vpack.c.bf16 %v1625, %v1625
        %v1642 = vpack.c.bf16 %v1626, %v1626
        %v1643 = vpack.c.bf16 %v1627, %v1627
        %v1644 = vpack.c.bf16 %v1628, %v1628
        %v1645 = vpack.c.bf16 %v1629, %v1629
        %v1646 = vpack.c.bf16 %v1630, %v1630
        %v1647 = vld [vmem:[#allocation9 + $0x68] sm:$0x1]
        %v1648 = vlaneseq
        %v1649 = vshrl.u32 %v1648, 7
        %v1650 = vsub.s32 0, %v1649
        %v1651 = vrot.slane %v1647, %v1650
        %v1668 = vunpack.c.l.b16 %v1099
        %v1669 = vunpack.c.h.b16 %v1099
        %v1670 = vunpack.c.l.b16 %v1100
        %v1671 = vunpack.c.h.b16 %v1100
        %v1672 = vunpack.c.l.b16 %v1101
        %v1673 = vunpack.c.h.b16 %v1101
        %v1674 = vunpack.c.l.b16 %v1102
        %v1675 = vunpack.c.h.b16 %v1102
        %v1676 = vunpack.c.l.b16 %v1103
        %v1677 = vunpack.c.h.b16 %v1103
        %v1678 = vunpack.c.l.b16 %v1104
        %v1679 = vunpack.c.h.b16 %v1104
        %v1680 = vunpack.c.l.b16 %v1105
        %v1681 = vunpack.c.h.b16 %v1105
        %v1682 = vunpack.c.l.b16 %v1106
        %v1683 = vunpack.c.h.b16 %v1106
        %v1684 = vunpack.c.l.b16 %v1107
        %v1685 = vunpack.c.h.b16 %v1107
        %v1686 = vunpack.c.l.b16 %v1108
        %v1687 = vunpack.c.h.b16 %v1108
        %v1688 = vunpack.c.l.b16 %v1109
        %v1689 = vunpack.c.h.b16 %v1109
        %v1690 = vunpack.c.l.b16 %v1110
        %v1691 = vunpack.c.h.b16 %v1110
        %v1692 = vunpack.c.l.b16 %v1111
        %v1693 = vunpack.c.h.b16 %v1111
        %v1694 = vunpack.c.l.b16 %v1112
        %v1695 = vunpack.c.h.b16 %v1112
        %v1696 = vunpack.c.l.b16 %v1113
        %v1697 = vunpack.c.h.b16 %v1113
        %v1698 = vunpack.c.l.b16 %v1114
        %v1699 = vunpack.c.h.b16 %v1114
        %v1700 = vpack.c.b16 %v1684, %v1668
        %v1701 = vpack.c.b16 %v1685, %v1669
        %v1702 = vpack.c.b16 %v1686, %v1670
        %v1703 = vpack.c.b16 %v1687, %v1671
        %v1704 = vpack.c.b16 %v1688, %v1672
        %v1705 = vpack.c.b16 %v1689, %v1673
        %v1706 = vpack.c.b16 %v1690, %v1674
        %v1707 = vpack.c.b16 %v1691, %v1675
        %v1708 = vpack.c.b16 %v1692, %v1676
        %v1709 = vpack.c.b16 %v1693, %v1677
        %v1710 = vpack.c.b16 %v1694, %v1678
        %v1711 = vpack.c.b16 %v1695, %v1679
        %v1712 = vpack.c.b16 %v1696, %v1680
        %v1713 = vpack.c.b16 %v1697, %v1681
        %v1714 = vpack.c.b16 %v1698, %v1682
        %v1715 = vpack.c.b16 %v1699, %v1683
        %1732 = vmatprep.subr.bf16.mxu0 0
        %1733 = vmatpush1.bf16.xpose.msra.mxu0 0
        %1734 = vmatprep.subr.bf16.mxu0 0
        %1735 = vmatpush1.bf16.xpose.msra.mxu0 0
        %1736 = vmatprep.subr.bf16.mxu0 0
        %1737 = vmatpush1.bf16.xpose.msra.mxu0 0
        %1738 = vmatprep.subr.bf16.mxu0 0
        %1739 = vmatpush1.bf16.xpose.msra.mxu0 0
        %1740 = vmatprep.subr.bf16.mxu0 0
        %1741 = vmatpush1.bf16.xpose.msra.mxu0 0
        %1742 = vmatprep.subr.bf16.mxu0 0
        %1743 = vmatpush1.bf16.xpose.msra.mxu0 0
        %1744 = vmatprep.subr.bf16.mxu0 0
        %1745 = vmatpush1.bf16.xpose.msra.mxu0 0
        %1746 = vmatprep.subr.bf16.mxu0 %v1701
        %1747 = vmatpush1.bf16.xpose.msra.mxu0 %v1700
        %1748 = vmatprep.subr.bf16.mxu0 0
        %1749 = vmatpush2.bf16.xpose.msra.mxu0 0
        %1750 = vmatprep.subr.bf16.mxu0 0
        %1751 = vmatpush2.bf16.xpose.msra.mxu0 0
        %1752 = vmatprep.subr.bf16.mxu0 0
        %1753 = vmatpush2.bf16.xpose.msra.mxu0 0
        %1754 = vmatprep.subr.bf16.mxu0 0
        %1755 = vmatpush2.bf16.xpose.msra.mxu0 0
        %1756 = vmatprep.subr.bf16.mxu0 0
        %1757 = vmatpush2.bf16.xpose.msra.mxu0 0
        %1758 = vmatprep.subr.bf16.mxu0 0
        %1759 = vmatpush2.bf16.xpose.msra.mxu0 0
        %1760 = vmatprep.subr.bf16.mxu0 0
        %1761 = vmatpush2.bf16.xpose.msra.mxu0 0
        %1762 = vmatprep.subr.bf16.mxu0 0
        %1763 = vmatpush2.bf16.xpose.msra.mxu0 0
        %1764 = vmatprep.mubr.bf16.mxu0 %v1632
        %1765 = vmatmul.mubr.bf16.gmra.mxu0 %v1631
        %v1766 = vpop.f32.mrf.mxu0
        %v1767 = vadd.f32 %v1651, %v1766
        %v1768 = vpop.f32.mrf.mxu0
        %v1769 = vpop.f32.mrf.mxu0
        %v1770 = vpop.f32.mrf.mxu0
        %1771 = vdwg.mxu0
        %1772 = vmatprep.subr.bf16.mxu0 0
        %1773 = vmatpush1.bf16.xpose.msra.mxu0 0
        %1774 = vmatprep.subr.bf16.mxu0 0
        %1775 = vmatpush1.bf16.xpose.msra.mxu0 0
        %1776 = vmatprep.subr.bf16.mxu0 0
        %1777 = vmatpush1.bf16.xpose.msra.mxu0 0
        %1778 = vmatprep.subr.bf16.mxu0 0
        %1779 = vmatpush1.bf16.xpose.msra.mxu0 0
        %1780 = vmatprep.subr.bf16.mxu0 0
        %1781 = vmatpush1.bf16.xpose.msra.mxu0 0
        %1782 = vmatprep.subr.bf16.mxu0 0
        %1783 = vmatpush1.bf16.xpose.msra.mxu0 0
        %1784 = vmatprep.subr.bf16.mxu0 0
        %1785 = vmatpush1.bf16.xpose.msra.mxu0 0
        %1786 = vmatprep.subr.bf16.mxu0 %v1703
        %1787 = vmatpush1.bf16.xpose.msra.mxu0 %v1702
        %1788 = vmatprep.subr.bf16.mxu0 0
        %1789 = vmatpush2.bf16.xpose.msra.mxu0 0
        %1790 = vmatprep.subr.bf16.mxu0 0
        %1791 = vmatpush2.bf16.xpose.msra.mxu0 0
        %1792 = vmatprep.subr.bf16.mxu0 0
        %1793 = vmatpush2.bf16.xpose.msra.mxu0 0
        %1794 = vmatprep.subr.bf16.mxu0 0
        %1795 = vmatpush2.bf16.xpose.msra.mxu0 0
        %1796 = vmatprep.subr.bf16.mxu0 0
        %1797 = vmatpush2.bf16.xpose.msra.mxu0 0
        %1798 = vmatprep.subr.bf16.mxu0 0
        %1799 = vmatpush2.bf16.xpose.msra.mxu0 0
        %1800 = vmatprep.subr.bf16.mxu0 0
        %1801 = vmatpush2.bf16.xpose.msra.mxu0 0
        %1802 = vmatprep.subr.bf16.mxu0 0
        %1803 = vmatpush2.bf16.xpose.msra.mxu0 0
        %1804 = vmatprep.mubr.bf16.mxu0 %v1634
        %1805 = vmatmul.mubr.bf16.gmra.mxu0 %v1633
        %v1806 = vpop.f32.mrf.mxu0
        %v1807 = vadd.f32 %v1767, %v1806
        %v1808 = vpop.f32.mrf.mxu0
        %v1809 = vpop.f32.mrf.mxu0
        %v1810 = vpop.f32.mrf.mxu0
        %1811 = vdwg.mxu0
        %1812 = vmatprep.subr.bf16.mxu0 0
        %1813 = vmatpush1.bf16.xpose.msra.mxu0 0
        %1814 = vmatprep.subr.bf16.mxu0 0
        %1815 = vmatpush1.bf16.xpose.msra.mxu0 0
        %1816 = vmatprep.subr.bf16.mxu0 0
        %1817 = vmatpush1.bf16.xpose.msra.mxu0 0
        %1818 = vmatprep.subr.bf16.mxu0 0
        %1819 = vmatpush1.bf16.xpose.msra.mxu0 0
        %1820 = vmatprep.subr.bf16.mxu0 0
        %1821 = vmatpush1.bf16.xpose.msra.mxu0 0
        %1822 = vmatprep.subr.bf16.mxu0 0
        %1823 = vmatpush1.bf16.xpose.msra.mxu0 0
        %1824 = vmatprep.subr.bf16.mxu0 0
        %1825 = vmatpush1.bf16.xpose.msra.mxu0 0
        %1826 = vmatprep.subr.bf16.mxu0 %v1705
        %1827 = vmatpush1.bf16.xpose.msra.mxu0 %v1704
        %1828 = vmatprep.subr.bf16.mxu0 0
        %1829 = vmatpush2.bf16.xpose.msra.mxu0 0
        %1830 = vmatprep.subr.bf16.mxu0 0
        %1831 = vmatpush2.bf16.xpose.msra.mxu0 0
        %1832 = vmatprep.subr.bf16.mxu0 0
        %1833 = vmatpush2.bf16.xpose.msra.mxu0 0
        %1834 = vmatprep.subr.bf16.mxu0 0
        %1835 = vmatpush2.bf16.xpose.msra.mxu0 0
        %1836 = vmatprep.subr.bf16.mxu0 0
        %1837 = vmatpush2.bf16.xpose.msra.mxu0 0
        %1838 = vmatprep.subr.bf16.mxu0 0
        %1839 = vmatpush2.bf16.xpose.msra.mxu0 0
        %1840 = vmatprep.subr.bf16.mxu0 0
        %1841 = vmatpush2.bf16.xpose.msra.mxu0 0
        %1842 = vmatprep.subr.bf16.mxu0 0
        %1843 = vmatpush2.bf16.xpose.msra.mxu0 0
        %1844 = vmatprep.mubr.bf16.mxu0 %v1636
        %1845 = vmatmul.mubr.bf16.gmra.mxu0 %v1635
        %v1846 = vpop.f32.mrf.mxu0
        %v1847 = vadd.f32 %v1807, %v1846
        %v1848 = vpop.f32.mrf.mxu0
        %v1849 = vpop.f32.mrf.mxu0
        %v1850 = vpop.f32.mrf.mxu0
        %1851 = vdwg.mxu0
        %1852 = vmatprep.subr.bf16.mxu0 0
        %1853 = vmatpush1.bf16.xpose.msra.mxu0 0
        %1854 = vmatprep.subr.bf16.mxu0 0
        %1855 = vmatpush1.bf16.xpose.msra.mxu0 0
        %1856 = vmatprep.subr.bf16.mxu0 0
        %1857 = vmatpush1.bf16.xpose.msra.mxu0 0
        %1858 = vmatprep.subr.bf16.mxu0 0
        %1859 = vmatpush1.bf16.xpose.msra.mxu0 0
        %1860 = vmatprep.subr.bf16.mxu0 0
        %1861 = vmatpush1.bf16.xpose.msra.mxu0 0
        %1862 = vmatprep.subr.bf16.mxu0 0
        %1863 = vmatpush1.bf16.xpose.msra.mxu0 0
        %1864 = vmatprep.subr.bf16.mxu0 0
        %1865 = vmatpush1.bf16.xpose.msra.mxu0 0
        %1866 = vmatprep.subr.bf16.mxu0 %v1707
        %1867 = vmatpush1.bf16.xpose.msra.mxu0 %v1706
        %1868 = vmatprep.subr.bf16.mxu0 0
        %1869 = vmatpush2.bf16.xpose.msra.mxu0 0
        %1870 = vmatprep.subr.bf16.mxu0 0
        %1871 = vmatpush2.bf16.xpose.msra.mxu0 0
        %1872 = vmatprep.subr.bf16.mxu0 0
        %1873 = vmatpush2.bf16.xpose.msra.mxu0 0
        %1874 = vmatprep.subr.bf16.mxu0 0
        %1875 = vmatpush2.bf16.xpose.msra.mxu0 0
        %1876 = vmatprep.subr.bf16.mxu0 0
        %1877 = vmatpush2.bf16.xpose.msra.mxu0 0
        %1878 = vmatprep.subr.bf16.mxu0 0
        %1879 = vmatpush2.bf16.xpose.msra.mxu0 0
        %1880 = vmatprep.subr.bf16.mxu0 0
        %1881 = vmatpush2.bf16.xpose.msra.mxu0 0
        %1882 = vmatprep.subr.bf16.mxu0 0
        %1883 = vmatpush2.bf16.xpose.msra.mxu0 0
        %1884 = vmatprep.mubr.bf16.mxu0 %v1638
        %1885 = vmatmul.mubr.bf16.gmra.mxu0 %v1637
        %v1886 = vpop.f32.mrf.mxu0
        %v1887 = vadd.f32 %v1847, %v1886
        %v1888 = vpop.f32.mrf.mxu0
        %v1889 = vpop.f32.mrf.mxu0
        %v1890 = vpop.f32.mrf.mxu0
        %1891 = vdwg.mxu0
        %1892 = vmatprep.subr.bf16.mxu0 0
        %1893 = vmatpush1.bf16.xpose.msra.mxu0 0
        %1894 = vmatprep.subr.bf16.mxu0 0
        %1895 = vmatpush1.bf16.xpose.msra.mxu0 0
        %1896 = vmatprep.subr.bf16.mxu0 0
        %1897 = vmatpush1.bf16.xpose.msra.mxu0 0
        %1898 = vmatprep.subr.bf16.mxu0 0
        %1899 = vmatpush1.bf16.xpose.msra.mxu0 0
        %1900 = vmatprep.subr.bf16.mxu0 0
        %1901 = vmatpush1.bf16.xpose.msra.mxu0 0
        %1902 = vmatprep.subr.bf16.mxu0 0
        %1903 = vmatpush1.bf16.xpose.msra.mxu0 0
        %1904 = vmatprep.subr.bf16.mxu0 0
        %1905 = vmatpush1.bf16.xpose.msra.mxu0 0
        %1906 = vmatprep.subr.bf16.mxu0 %v1709
        %1907 = vmatpush1.bf16.xpose.msra.mxu0 %v1708
        %1908 = vmatprep.subr.bf16.mxu0 0
        %1909 = vmatpush2.bf16.xpose.msra.mxu0 0
        %1910 = vmatprep.subr.bf16.mxu0 0
        %1911 = vmatpush2.bf16.xpose.msra.mxu0 0
        %1912 = vmatprep.subr.bf16.mxu0 0
        %1913 = vmatpush2.bf16.xpose.msra.mxu0 0
        %1914 = vmatprep.subr.bf16.mxu0 0
        %1915 = vmatpush2.bf16.xpose.msra.mxu0 0
        %1916 = vmatprep.subr.bf16.mxu0 0
        %1917 = vmatpush2.bf16.xpose.msra.mxu0 0
        %1918 = vmatprep.subr.bf16.mxu0 0
        %1919 = vmatpush2.bf16.xpose.msra.mxu0 0
        %1920 = vmatprep.subr.bf16.mxu0 0
        %1921 = vmatpush2.bf16.xpose.msra.mxu0 0
        %1922 = vmatprep.subr.bf16.mxu0 0
        %1923 = vmatpush2.bf16.xpose.msra.mxu0 0
        %1924 = vmatprep.mubr.bf16.mxu0 %v1640
        %1925 = vmatmul.mubr.bf16.gmra.mxu0 %v1639
        %v1926 = vpop.f32.mrf.mxu0
        %v1927 = vadd.f32 %v1887, %v1926
        %v1928 = vpop.f32.mrf.mxu0
        %v1929 = vpop.f32.mrf.mxu0
        %v1930 = vpop.f32.mrf.mxu0
        %1931 = vdwg.mxu0
        %1932 = vmatprep.subr.bf16.mxu0 0
        %1933 = vmatpush1.bf16.xpose.msra.mxu0 0
        %1934 = vmatprep.subr.bf16.mxu0 0
        %1935 = vmatpush1.bf16.xpose.msra.mxu0 0
        %1936 = vmatprep.subr.bf16.mxu0 0
        %1937 = vmatpush1.bf16.xpose.msra.mxu0 0
        %1938 = vmatprep.subr.bf16.mxu0 0
        %1939 = vmatpush1.bf16.xpose.msra.mxu0 0
        %1940 = vmatprep.subr.bf16.mxu0 0
        %1941 = vmatpush1.bf16.xpose.msra.mxu0 0
        %1942 = vmatprep.subr.bf16.mxu0 0
        %1943 = vmatpush1.bf16.xpose.msra.mxu0 0
        %1944 = vmatprep.subr.bf16.mxu0 0
        %1945 = vmatpush1.bf16.xpose.msra.mxu0 0
        %1946 = vmatprep.subr.bf16.mxu0 %v1711
        %1947 = vmatpush1.bf16.xpose.msra.mxu0 %v1710
        %1948 = vmatprep.subr.bf16.mxu0 0
        %1949 = vmatpush2.bf16.xpose.msra.mxu0 0
        %1950 = vmatprep.subr.bf16.mxu0 0
        %1951 = vmatpush2.bf16.xpose.msra.mxu0 0
        %1952 = vmatprep.subr.bf16.mxu0 0
        %1953 = vmatpush2.bf16.xpose.msra.mxu0 0
        %1954 = vmatprep.subr.bf16.mxu0 0
        %1955 = vmatpush2.bf16.xpose.msra.mxu0 0
        %1956 = vmatprep.subr.bf16.mxu0 0
        %1957 = vmatpush2.bf16.xpose.msra.mxu0 0
        %1958 = vmatprep.subr.bf16.mxu0 0
        %1959 = vmatpush2.bf16.xpose.msra.mxu0 0
        %1960 = vmatprep.subr.bf16.mxu0 0
        %1961 = vmatpush2.bf16.xpose.msra.mxu0 0
        %1962 = vmatprep.subr.bf16.mxu0 0
        %1963 = vmatpush2.bf16.xpose.msra.mxu0 0
        %1964 = vmatprep.mubr.bf16.mxu0 %v1642
        %1965 = vmatmul.mubr.bf16.gmra.mxu0 %v1641
        %v1966 = vpop.f32.mrf.mxu0
        %v1967 = vadd.f32 %v1927, %v1966
        %v1968 = vpop.f32.mrf.mxu0
        %v1969 = vpop.f32.mrf.mxu0
        %v1970 = vpop.f32.mrf.mxu0
        %1971 = vdwg.mxu0
        %1972 = vmatprep.subr.bf16.mxu0 0
        %1973 = vmatpush1.bf16.xpose.msra.mxu0 0
        %1974 = vmatprep.subr.bf16.mxu0 0
        %1975 = vmatpush1.bf16.xpose.msra.mxu0 0
        %1976 = vmatprep.subr.bf16.mxu0 0
        %1977 = vmatpush1.bf16.xpose.msra.mxu0 0
        %1978 = vmatprep.subr.bf16.mxu0 0
        %1979 = vmatpush1.bf16.xpose.msra.mxu0 0
        %1980 = vmatprep.subr.bf16.mxu0 0
        %1981 = vmatpush1.bf16.xpose.msra.mxu0 0
        %1982 = vmatprep.subr.bf16.mxu0 0
        %1983 = vmatpush1.bf16.xpose.msra.mxu0 0
        %1984 = vmatprep.subr.bf16.mxu0 0
        %1985 = vmatpush1.bf16.xpose.msra.mxu0 0
        %1986 = vmatprep.subr.bf16.mxu0 %v1713
        %1987 = vmatpush1.bf16.xpose.msra.mxu0 %v1712
        %1988 = vmatprep.subr.bf16.mxu0 0
        %1989 = vmatpush2.bf16.xpose.msra.mxu0 0
        %1990 = vmatprep.subr.bf16.mxu0 0
        %1991 = vmatpush2.bf16.xpose.msra.mxu0 0
        %1992 = vmatprep.subr.bf16.mxu0 0
        %1993 = vmatpush2.bf16.xpose.msra.mxu0 0
        %1994 = vmatprep.subr.bf16.mxu0 0
        %1995 = vmatpush2.bf16.xpose.msra.mxu0 0
        %1996 = vmatprep.subr.bf16.mxu0 0
        %1997 = vmatpush2.bf16.xpose.msra.mxu0 0
        %1998 = vmatprep.subr.bf16.mxu0 0
        %1999 = vmatpush2.bf16.xpose.msra.mxu0 0
        %2000 = vmatprep.subr.bf16.mxu0 0
        %2001 = vmatpush2.bf16.xpose.msra.mxu0 0
        %2002 = vmatprep.subr.bf16.mxu0 0
        %2003 = vmatpush2.bf16.xpose.msra.mxu0 0
        %2004 = vmatprep.mubr.bf16.mxu0 %v1644
        %2005 = vmatmul.mubr.bf16.gmra.mxu0 %v1643
        %v2006 = vpop.f32.mrf.mxu0
        %v2007 = vadd.f32 %v1967, %v2006
        %v2008 = vpop.f32.mrf.mxu0
        %v2009 = vpop.f32.mrf.mxu0
        %v2010 = vpop.f32.mrf.mxu0
        %2011 = vdwg.mxu0
        %2012 = vmatprep.subr.bf16.mxu0 0
        %2013 = vmatpush1.bf16.xpose.msra.mxu0 0
        %2014 = vmatprep.subr.bf16.mxu0 0
        %2015 = vmatpush1.bf16.xpose.msra.mxu0 0
        %2016 = vmatprep.subr.bf16.mxu0 0
        %2017 = vmatpush1.bf16.xpose.msra.mxu0 0
        %2018 = vmatprep.subr.bf16.mxu0 0
        %2019 = vmatpush1.bf16.xpose.msra.mxu0 0
        %2020 = vmatprep.subr.bf16.mxu0 0
        %2021 = vmatpush1.bf16.xpose.msra.mxu0 0
        %2022 = vmatprep.subr.bf16.mxu0 0
        %2023 = vmatpush1.bf16.xpose.msra.mxu0 0
        %2024 = vmatprep.subr.bf16.mxu0 0
        %2025 = vmatpush1.bf16.xpose.msra.mxu0 0
        %2026 = vmatprep.subr.bf16.mxu0 %v1715
        %2027 = vmatpush1.bf16.xpose.msra.mxu0 %v1714
        %2028 = vmatprep.subr.bf16.mxu0 0
        %2029 = vmatpush2.bf16.xpose.msra.mxu0 0
        %2030 = vmatprep.subr.bf16.mxu0 0
        %2031 = vmatpush2.bf16.xpose.msra.mxu0 0
        %2032 = vmatprep.subr.bf16.mxu0 0
        %2033 = vmatpush2.bf16.xpose.msra.mxu0 0
        %2034 = vmatprep.subr.bf16.mxu0 0
        %2035 = vmatpush2.bf16.xpose.msra.mxu0 0
        %2036 = vmatprep.subr.bf16.mxu0 0
        %2037 = vmatpush2.bf16.xpose.msra.mxu0 0
        %2038 = vmatprep.subr.bf16.mxu0 0
        %2039 = vmatpush2.bf16.xpose.msra.mxu0 0
        %2040 = vmatprep.subr.bf16.mxu0 0
        %2041 = vmatpush2.bf16.xpose.msra.mxu0 0
        %2042 = vmatprep.subr.bf16.mxu0 0
        %2043 = vmatpush2.bf16.xpose.msra.mxu0 0
        %2044 = vmatprep.mubr.bf16.mxu0 %v1646
        %2045 = vmatmul.mubr.bf16.gmra.mxu0 %v1645
        %v2046 = vpop.f32.mrf.mxu0
        %v2047 = vadd.f32 %v2007, %v2046
        %v2048 = vpop.f32.mrf.mxu0
        %v2049 = vpop.f32.mrf.mxu0
        %v2050 = vpop.f32.mrf.mxu0
        %2051 = vdwg.mxu0
        %v2052 = vadd.f32 %v1082, %v2047
        %v2053 = vld [vmem:[#allocation9 + $0x58] sm:$0x1]
        %v2054 = vld [vmem:[#allocation9 + $0x60] sm:$0x1]
        %v2055 = vsel %vm360, %v2052, 0.0
        %2056 = vadd.xlane.f32.xlu0 %v2055
        %v2057 = vpop.xlane.xlu0 %2056
        %v2058 = vmul.f32 %v2057, %v1062
        %v2059 = vsub.f32 %v2052, %v2058
        %v2060 = vmul.f32 %v2059, %v2059
        %v2061 = vsel %vm360, %v2060, 0.0
        %2062 = vadd.xlane.f32.xlu0 %v2061
        %v2063 = vpop.xlane.xlu0 %2062
        %v2064 = vmul.f32 %v2063, %v1062
        %v2065 = vadd.f32 %v2064, 1e-05
        %v2066 = vrsqrt.pop %v2065
        %v2067 = vmul.f32 %v2059, %v2066
        %v2068 = vlaneseq
        %v2069 = vshrl.u32 %v2068, 7
        %v2070 = vsub.s32 0, %v2069
        %v2071 = vrot.slane %v2053, %v2070
        %v2072 = vmul.f32 %v2067, %v2071
        %v2073 = vlaneseq
        %v2074 = vshrl.u32 %v2073, 7
        %v2075 = vsub.s32 0, %v2074
        %v2076 = vrot.slane %v2054, %v2075
        %v2077 = vadd.f32 %v2072, %v2076
        %v2078 = vld [vmem:[#allocation9 + $0x70] sm:$0xff]
        %v2079 = vld [vmem:[#allocation9 + $0x78] sm:$0xff]
        %v2080 = vld [vmem:[#allocation9 + $0x80] sm:$0x1]
        %v2081 = vlaneseq
        %v2082 = vshrl.u32 %v2081, 7
        %v2083 = vsub.s32 0, %v2082
        %v2084 = vrot.slane %v2080, %v2083
        %v2086 = vsel %vm360, %v2077, 0
        %2088 = vmatprep.subr.mxu0 0.0
        %2089 = vmatpush1.msra.mxu0 0.0
        %2090 = vmatprep.subr.mxu0 0.0
        %2091 = vmatpush1.msra.mxu0 0.0
        %2092 = vmatprep.subr.mxu0 0.0
        %2093 = vmatpush1.msra.mxu0 0.0
        %2094 = vmatprep.subr.mxu0 0.0
        %2095 = vmatpush1.msra.mxu0 0.0
        %2096 = vmatprep.subr.mxu0 0.0
        %2097 = vmatpush1.msra.mxu0 0.0
        %2098 = vmatprep.subr.mxu0 0.0
        %2099 = vmatpush1.msra.mxu0 0.0
        %2100 = vmatprep.subr.mxu0 0.0
        %2101 = vmatpush1.msra.mxu0 0.0
        %2102 = vmatprep.subr.mxu0 0.0
        %2103 = vmatpush1.msra.mxu0 0.0
        %2104 = vmatprep.subr.mxu0 0.0
        %2105 = vmatpush1.msra.mxu0 0.0
        %2106 = vmatprep.subr.mxu0 0.0
        %2107 = vmatpush1.msra.mxu0 0.0
        %2108 = vmatprep.subr.mxu0 0.0
        %2109 = vmatpush1.msra.mxu0 0.0
        %2110 = vmatprep.subr.mxu0 0.0
        %2111 = vmatpush1.msra.mxu0 0.0
        %2112 = vmatprep.subr.mxu0 0.0
        %2113 = vmatpush1.msra.mxu0 0.0
        %2114 = vmatprep.subr.mxu0 0.0
        %2115 = vmatpush1.msra.mxu0 0.0
        %2116 = vmatprep.subr.mxu0 0.0
        %2117 = vmatpush1.msra.mxu0 %v2079
        %2118 = vmatprep.subr.mxu0 0.0
        %2119 = vmatpush1.msra.mxu0 %v2078
        %2120 = vmatprep.subr.mxu0 0.0
        %2121 = vmatpush2.msra.mxu0 0.0
        %2122 = vmatprep.subr.mxu0 0.0
        %2123 = vmatpush2.msra.mxu0 0.0
        %2124 = vmatprep.subr.mxu0 0.0
        %2125 = vmatpush2.msra.mxu0 0.0
        %2126 = vmatprep.subr.mxu0 0.0
        %2127 = vmatpush2.msra.mxu0 0.0
        %2128 = vmatprep.subr.mxu0 0.0
        %2129 = vmatpush2.msra.mxu0 0.0
        %2130 = vmatprep.subr.mxu0 0.0
        %2131 = vmatpush2.msra.mxu0 0.0
        %2132 = vmatprep.subr.mxu0 0.0
        %2133 = vmatpush2.msra.mxu0 0.0
        %2134 = vmatprep.subr.mxu0 0.0
        %2135 = vmatpush2.msra.mxu0 0.0
        %2136 = vmatprep.subr.mxu0 0.0
        %2137 = vmatpush2.msra.mxu0 0.0
        %2138 = vmatprep.subr.mxu0 0.0
        %2139 = vmatpush2.msra.mxu0 0.0
        %2140 = vmatprep.subr.mxu0 0.0
        %2141 = vmatpush2.msra.mxu0 0.0
        %2142 = vmatprep.subr.mxu0 0.0
        %2143 = vmatpush2.msra.mxu0 0.0
        %2144 = vmatprep.subr.mxu0 0.0
        %2145 = vmatpush2.msra.mxu0 0.0
        %2146 = vmatprep.subr.mxu0 0.0
        %2147 = vmatpush2.msra.mxu0 0.0
        %2148 = vmatprep.subr.mxu0 0.0
        %2149 = vmatpush2.msra.mxu0 0.0
        %2150 = vmatprep.subr.mxu0 0.0
        %2151 = vmatpush2.msra.mxu0 0.0
        %2152 = vmatprep.mubr.f32.mxu0 0.0
        %2153 = vmatmul.mubr.f32.gmra.mxu0 %v2086
        %v2154 = vpop.f32.mrf.mxu0
        %v2155 = vadd.f32 %v2084, %v2154
        %v2156 = vpop.f32.mrf.mxu0
        %2157 = vdwg.mxu0
        %v2158 = vmax.f32 %v2155, 0.0
        %v2159 = vld [vmem:[#allocation2] sm:$0xff]
        %2161 = vrot.lane.b32.xlu0 %v2159, 32
        %v2162 = vpop.permute.xlu0 %2161
        %vm2164 = vcmask 261120
        %v2165 = vsel %vm2164, %v2158, %v2162
        %v2166 = vld [vmem:[#allocation9 + $0x88] sm:$0xff]
        %v2167 = vld [vmem:[#allocation9 + $0x90] sm:$0xff]
        %v2168 = vld [vmem:[#allocation9 + $0x98] sm:$0xff]
        %v2169 = vld [vmem:[#allocation9 + $0xa0] sm:$0xff]
        %v2170 = vld [vmem:[#allocation9 + $0xa8] sm:$0xff]
        %v2171 = vld [vmem:[#allocation9 + $0xb0] sm:$0xff]
        %v2172 = vld [vmem:[#allocation9 + $0xb8] sm:$0xff]
        %v2173 = vld [vmem:[#allocation9 + $0xc0] sm:$0xff]
        %v2174 = vld [vmem:[#allocation9 + $0xc8] sm:$0x1]
        %v2175 = vlaneseq
        %v2176 = vshrl.u32 %v2175, 7
        %v2177 = vsub.s32 0, %v2176
        %v2178 = vrot.slane %v2174, %v2177
        %v2180 = vsel %vm902, %v2165, 0
        %2182 = vmatprep.subr.mxu0 0.0
        %2183 = vmatpush1.msra.mxu0 0.0
        %2184 = vmatprep.subr.mxu0 0.0
        %2185 = vmatpush1.msra.mxu0 0.0
        %2186 = vmatprep.subr.mxu0 0.0
        %2187 = vmatpush1.msra.mxu0 0.0
        %2188 = vmatprep.subr.mxu0 0.0
        %2189 = vmatpush1.msra.mxu0 0.0
        %2190 = vmatprep.subr.mxu0 0.0
        %2191 = vmatpush1.msra.mxu0 0.0
        %2192 = vmatprep.subr.mxu0 0.0
        %2193 = vmatpush1.msra.mxu0 0.0
        %2194 = vmatprep.subr.mxu0 0.0
        %2195 = vmatpush1.msra.mxu0 0.0
        %2196 = vmatprep.subr.mxu0 0.0
        %2197 = vmatpush1.msra.mxu0 0.0
        %2198 = vmatprep.subr.mxu0 0.0
        %2199 = vmatpush1.msra.mxu0 %v2173
        %2200 = vmatprep.subr.mxu0 0.0
        %2201 = vmatpush1.msra.mxu0 %v2172
        %2202 = vmatprep.subr.mxu0 0.0
        %2203 = vmatpush1.msra.mxu0 %v2171
        %2204 = vmatprep.subr.mxu0 0.0
        %2205 = vmatpush1.msra.mxu0 %v2170
        %2206 = vmatprep.subr.mxu0 0.0
        %2207 = vmatpush1.msra.mxu0 %v2169
        %2208 = vmatprep.subr.mxu0 0.0
        %2209 = vmatpush1.msra.mxu0 %v2168
        %2210 = vmatprep.subr.mxu0 0.0
        %2211 = vmatpush1.msra.mxu0 %v2167
        %2212 = vmatprep.subr.mxu0 0.0
        %2213 = vmatpush1.msra.mxu0 %v2166
        %2214 = vmatprep.subr.mxu0 0.0
        %2215 = vmatpush2.msra.mxu0 0.0
        %2216 = vmatprep.subr.mxu0 0.0
        %2217 = vmatpush2.msra.mxu0 0.0
        %2218 = vmatprep.subr.mxu0 0.0
        %2219 = vmatpush2.msra.mxu0 0.0
        %2220 = vmatprep.subr.mxu0 0.0
        %2221 = vmatpush2.msra.mxu0 0.0
        %2222 = vmatprep.subr.mxu0 0.0
        %2223 = vmatpush2.msra.mxu0 0.0
        %2224 = vmatprep.subr.mxu0 0.0
        %2225 = vmatpush2.msra.mxu0 0.0
        %2226 = vmatprep.subr.mxu0 0.0
        %2227 = vmatpush2.msra.mxu0 0.0
        %2228 = vmatprep.subr.mxu0 0.0
        %2229 = vmatpush2.msra.mxu0 0.0
        %2230 = vmatprep.subr.mxu0 0.0
        %2231 = vmatpush2.msra.mxu0 0.0
        %2232 = vmatprep.subr.mxu0 0.0
        %2233 = vmatpush2.msra.mxu0 0.0
        %2234 = vmatprep.subr.mxu0 0.0
        %2235 = vmatpush2.msra.mxu0 0.0
        %2236 = vmatprep.subr.mxu0 0.0
        %2237 = vmatpush2.msra.mxu0 0.0
        %2238 = vmatprep.subr.mxu0 0.0
        %2239 = vmatpush2.msra.mxu0 0.0
        %2240 = vmatprep.subr.mxu0 0.0
        %2241 = vmatpush2.msra.mxu0 0.0
        %2242 = vmatprep.subr.mxu0 0.0
        %2243 = vmatpush2.msra.mxu0 0.0
        %2244 = vmatprep.subr.mxu0 0.0
        %2245 = vmatpush2.msra.mxu0 0.0
        %2246 = vmatprep.mubr.f32.mxu0 0.0
        %2247 = vmatmul.mubr.f32.gmra.mxu0 %v2180
        %v2248 = vpop.f32.mrf.mxu0
        %v2249 = vadd.f32 %v2178, %v2248
        %v2250 = vpop.f32.mrf.mxu0
        %2251 = vdwg.mxu0
        %v2252 = vxor.u32 %v2249, 2147483648
        %v2253 = vmul.f32 %v2252, 1.442695
        %v2254 = vpow.pop %v2253
        %v2255 = vadd.f32 %v2254, 1.0
        %v2256 = vrcp.pop %v2255
        %v2257 = vmul.f32 1.0, %v2256
        %2259 = vrot.lane.b32.xlu0 %v2249, 32
        %v2260 = vpop.permute.xlu0 %2259
        %v2262 = vmul.f32 %v2257, %v2260
        %2264 = vrot.lane.b32.xlu0 %v2262, 64
        %v2265 = vpop.permute.xlu0 %2264
        %v2267 = vadd.f32 %v2249, %v2265
        %v2268 = vtanh.pop %v2267
        %v2269 = vsub.f32 1.0, %v2257
        %2271 = vrot.lane.b32.xlu0 %v2268, 96
        %v2272 = vpop.permute.xlu0 %2271
        %v2274 = vmul.f32 %v2269, %v2272
        %v2275 = vmul.f32 %v2257, %v2162
        %v2276 = vadd.f32 %v2274, %v2275
        %2278 = vrot.lane.b32.xlu0 %v2276, 96
        %v2279 = vpop.permute.xlu0 %2278
        %2281 = vst.msk [vmem:[#allocation2] sm:$0xff] %vm2164, %v2279
        %2282 = vst.msk [vmem:[#allocation13] sm:$0xff] %vm2164, %v2279
        %v2283 = vld [vmem:[#allocation9 + $0xd0] sm:$0xff]
        %v2284 = vld [vmem:[#allocation9 + $0xd8] sm:$0xff]
        %v2285 = vld [vmem:[#allocation9 + $0xe0] sm:$0xff]
        %v2286 = vld [vmem:[#allocation9 + $0xe8] sm:$0xff]
        %v2287 = vld [vmem:[#allocation9 + $0xf0] sm:$0x1]
        %v2288 = vlaneseq
        %v2289 = vshrl.u32 %v2288, 7
        %v2290 = vsub.s32 0, %v2289
        %v2291 = vrot.slane %v2287, %v2290
        %v2292 = vsel %vm2164, %v2279, 0
        %2294 = vmatprep.subr.mxu0 0.0
        %2295 = vmatpush1.msra.mxu0 0.0
        %2296 = vmatprep.subr.mxu0 0.0
        %2297 = vmatpush1.msra.mxu0 0.0
        %2298 = vmatprep.subr.mxu0 0.0
        %2299 = vmatpush1.msra.mxu0 0.0
        %2300 = vmatprep.subr.mxu0 0.0
        %2301 = vmatpush1.msra.mxu0 0.0
        %2302 = vmatprep.subr.mxu0 0.0
        %2303 = vmatpush1.msra.mxu0 0.0
        %2304 = vmatprep.subr.mxu0 0.0
        %2305 = vmatpush1.msra.mxu0 0.0
        %2306 = vmatprep.subr.mxu0 0.0
        %2307 = vmatpush1.msra.mxu0 0.0
        %2308 = vmatprep.subr.mxu0 0.0
        %2309 = vmatpush1.msra.mxu0 0.0
        %2310 = vmatprep.subr.mxu0 0.0
        %2311 = vmatpush1.msra.mxu0 0.0
        %2312 = vmatprep.subr.mxu0 0.0
        %2313 = vmatpush1.msra.mxu0 0.0
        %2314 = vmatprep.subr.mxu0 0.0
        %2315 = vmatpush1.msra.mxu0 0.0
        %2316 = vmatprep.subr.mxu0 0.0
        %2317 = vmatpush1.msra.mxu0 0.0
        %2318 = vmatprep.subr.mxu0 0.0
        %2319 = vmatpush1.msra.mxu0 %v2286
        %2320 = vmatprep.subr.mxu0 0.0
        %2321 = vmatpush1.msra.mxu0 %v2285
        %2322 = vmatprep.subr.mxu0 0.0
        %2323 = vmatpush1.msra.mxu0 %v2284
        %2324 = vmatprep.subr.mxu0 0.0
        %2325 = vmatpush1.msra.mxu0 %v2283
        %2326 = vmatprep.subr.mxu0 0.0
        %2327 = vmatpush2.msra.mxu0 0.0
        %2328 = vmatprep.subr.mxu0 0.0
        %2329 = vmatpush2.msra.mxu0 0.0
        %2330 = vmatprep.subr.mxu0 0.0
        %2331 = vmatpush2.msra.mxu0 0.0
        %2332 = vmatprep.subr.mxu0 0.0
        %2333 = vmatpush2.msra.mxu0 0.0
        %2334 = vmatprep.subr.mxu0 0.0
        %2335 = vmatpush2.msra.mxu0 0.0
        %2336 = vmatprep.subr.mxu0 0.0
        %2337 = vmatpush2.msra.mxu0 0.0
        %2338 = vmatprep.subr.mxu0 0.0
        %2339 = vmatpush2.msra.mxu0 0.0
        %2340 = vmatprep.subr.mxu0 0.0
        %2341 = vmatpush2.msra.mxu0 0.0
        %2342 = vmatprep.subr.mxu0 0.0
        %2343 = vmatpush2.msra.mxu0 0.0
        %2344 = vmatprep.subr.mxu0 0.0
        %2345 = vmatpush2.msra.mxu0 0.0
        %2346 = vmatprep.subr.mxu0 0.0
        %2347 = vmatpush2.msra.mxu0 0.0
        %2348 = vmatprep.subr.mxu0 0.0
        %2349 = vmatpush2.msra.mxu0 0.0
        %2350 = vmatprep.subr.mxu0 0.0
        %2351 = vmatpush2.msra.mxu0 0.0
        %2352 = vmatprep.subr.mxu0 0.0
        %2353 = vmatpush2.msra.mxu0 0.0
        %2354 = vmatprep.subr.mxu0 0.0
        %2355 = vmatpush2.msra.mxu0 0.0
        %2356 = vmatprep.subr.mxu0 0.0
        %2357 = vmatpush2.msra.mxu0 0.0
        %2358 = vmatprep.mubr.f32.mxu0 0.0
        %2359 = vmatmul.mubr.f32.gmra.mxu0 %v2292
        %v2360 = vpop.f32.mrf.mxu0
        %v2361 = vadd.f32 %v2291, %v2360
        %v2362 = vpop.f32.mrf.mxu0
        %2363 = vdwg.mxu0
        %v2364 = vld [vmem:[%s298] sm:$0xff]
        %vm2365 = vcmp.lt.f32.partialorder %v2364, 0.5
        %v2366 = vsel %vm2365, -1e+10, %v2361
        %v2367 = vsel %vm673, %v2366, -inf
        %2368 = vmax.xlane.f32.xlu0 %v2367
        %v2369 = vpop.xlane.xlu0 %2368
        %v2370 = vsub.f32 %v2366, %v2369
        %v2371 = vmul.f32 %v2370, 1.442695
        %v2372 = vpow.pop %v2371
        %v2373 = vsel %vm673, %v2372, 0.0
        %2374 = vadd.xlane.f32.xlu0 %v2373
        %v2375 = vpop.xlane.xlu0 %2374
        %v2376 = vrcp.pop %v2375
        %v2377 = vmul.f32 %v2372, %v2376
        %2378 = vst.msk [vmem:[%s341] sm:$0xff] %vm673, %v2377
        %s2379 = sand.u32 %s152, 1
        %s2380 = scalar_lea.sflag [#allocation5], %s2379
        %s2381 = sand.u32 %s152, 1
        %s2382 = smul.addr %s2381, 8
        %s2383 = scalar_lea.vmem [#allocation12], %s2382
        // Predicated region
        $region65: #{fwd.1} parent=39 // pred_check
          %p2384 = pneg %p162
        $region66: #{fwd.1} parent=39 // pred_check_branch
          %2386 = sbr.rel (%p2384) target = $region68
        $region67: #{fwd.1} parent=39 // pred_region
          %s2388 = ssub.s32 128, 128
          %2389 = vsyncadd %s2380, %s2388
          %s2390 = smul.addr %s29, 128
          %s2391 = scalar_lea.hbm %s5, %s2390
          %s2393 = sshll.u32 %s2383, 4
          %s2394 = int_to_ptr.vmem [resolvable:$true] %s2393
          %2396 = dma.vmem_to_hbm [thread:$0]  %s2394, 128, %s2391, %s2380
        $region68: #{fwd.1} parent=39 // pred_fallthru
          _
        // Predicated region
        $region69: #{fwd.1} parent=39 // pred_check
          %p2397 = pneg %p183
        $region70: #{fwd.1} parent=39 // pred_check_branch
          %2399 = sbr.rel (%p2397) target = $region72
        $region71: #{fwd.1} parent=39 // pred_region
          %s2401 = ssub.s32 128, 128
          %2402 = vsyncadd [#allocation14], %s2401
          %s2404 = sshll.u32 [#allocation13], 4
          %s2405 = int_to_ptr.vmem [resolvable:$true] %s2404
          %2407 = dma.vmem_to_hbm [thread:$0]  %s2405, 128, %s6, [#allocation14]
        $region72: #{fwd.1} parent=39 // pred_fallthru
          _
        // Predicated region
        $region73: #{fwd.1} parent=39 // pred_check
          %p2408 = pneg %p183
        $region74: #{fwd.1} parent=39 // pred_check_branch
          %2410 = sbr.rel (%p2408) target = $region76
        $region75: #{fwd.1} parent=39 // pred_region
          %2411 = dma.done [#allocation14], 128
        $region76: #{fwd.1} parent=39 // pred_fallthru
          _
      $region40: #{fwd.1} parent=5 // pred_fallthru
        _
      %p2412 = scmp.le.s32.totalorder 2, %s24
      // Predicated region
      $region77: #{fwd.1} parent=5 // pred_check
        %p2413 = pneg %p2412
      $region78: #{fwd.1} parent=5 // pred_check_branch
        %2415 = sbr.rel (%p2413) target = $region80
      $region79: #{fwd.1} parent=5 // pred_region
        %s2416 = ssub.s32 %s24, 2
        // Predicated region
        $region81: #{fwd.1} parent=79 // pred_check
          %p2417 = pneg %p168
        $region82: #{fwd.1} parent=79 // pred_check_branch
          %2419 = sbr.rel (%p2417) target = $region84
        $region83: #{fwd.1} parent=79 // pred_region
          %s2420 = sand.u32 %s153, 1
          %s2421 = scalar_lea.sflag [#allocation5], %s2420
          %s2422 = sand.u32 %s153, 1
          %s2423 = smul.addr %s2422, 8
          %s2424 = scalar_lea.vmem [#allocation12], %s2423
          %2425 = dma.done %s2421, 128
        $region84: #{fwd.1} parent=79 // pred_fallthru
          _
      $region80: #{fwd.1} parent=5 // pred_fallthru
        _
    $region6: #{fwd.1} parent=1 // loop_footer
      %s28 = sadd.s32 1, %s24
    $region7: #{fwd.1} parent=1 // loop_footer_branch
      %23 = sbr.rel target = $region3
    $region8: #{fwd.1} parent=1 // loop_exit
      _
    %2426 = vsyncpa [#allocation4], 1
    %s2427 = scalar_lea.sflag [#allocation4], 1
    %2428 = vsyncpa %s2427, 1
    %2429 = vsyncpa [#allocation7], 1
    %s2430 = scalar_lea.sflag [#allocation7], 1
    %2431 = vsyncpa %s2430, 1
    %2432 = vsyncpa [#allocation10], 1
    %2433 = vsyncpa [#allocation5], 1
    %s2434 = scalar_lea.sflag [#allocation5], 1
    %2435 = vsyncpa %s2434, 1
    %2436 = vsyncpa [#allocation14], 1

</llo_original>
